<compile_context>
chip_gen: v7x
topology: tpu7x:2x2x1
jax: 0.10.0
libtpu: 0.0.40
codegen_flags: <defaults>
</compile_context>

<pallas_src>
import jax
import jax.numpy as jnp
from jax.experimental import pallas as pl
from jax.experimental.pallas import tpu as pltpu


def _make_splat_kernel(fh, fw, H, W, Ho, Wo):
    """Gather formulation: valid correlation of the (in-kernel) zero-padded
    input with the pre-flipped filter == the splat / full convolution."""

    def kernel(filt_ref, x_ref, out_ref, xpad_ref):
        # filt_ref : SMEM (fh*fw,)          pre-flipped filter taps
        # x_ref    : VMEM (H,  W,  Bblk)    input block  (planes on lanes)
        # out_ref  : VMEM (Ho, Wo, Bblk)    output block
        # xpad_ref : VMEM (Hp, Wp, Bblk)    zero-padded halo scratch
        #
        # Fused padding: memset the halo scratch and copy the input into its
        # interior.  Pure VMEM traffic; no extra HBM pass.
        xpad_ref[...] = jnp.zeros_like(xpad_ref)
        xpad_ref[pl.ds(fh - 1, H), pl.ds(fw - 1, W), :] = x_ref[...]

        # fh*fw is small -> fully unrolled taps.  Each tap shifts only the
        # leading (H) and sublane (W) dims; the lane dim (B) never moves.
        acc = jnp.zeros(out_ref.shape, jnp.float32)
        for di in range(fh):
            for dj in range(fw):
                w = filt_ref[di * fw + dj]            # scalar tap from SMEM
                acc = acc + w * xpad_ref[pl.ds(di, Ho), pl.ds(dj, Wo), :]

        out_ref[...] = acc.astype(out_ref.dtype)      # one dense aligned store

    return kernel


def _pick_lane_block(B, per_lane_bytes, budget_bytes=8 << 20):
    """Largest lane block (full B, or a multiple of 128) within a VMEM budget."""
    if B <= 128 or B * per_lane_bytes <= budget_bytes:
        return B                                       # single full-width block
    max_blk = max(128, (budget_bytes // per_lane_bytes) // 128 * 128)
    blk = min(max_blk, (B // 128) * 128)
    # Prefer a block that divides B exactly so every grid step is full.
    for cand in range(blk, 0, -128):
        if B % cand == 0:
            return cand
    return blk   # ragged last block: Pallas masks the out-of-range writeback


def splatter_forward(x, filt):
    """x: [N, C, H, W] float32, filt: [fh, fw] float32 (rows -> H, cols -> W).
    Returns [N, C, H + fh - 1, W + fw - 1] float32."""
    N, C, H, W = x.shape
    fh, fw = filt.shape
    Ho, Wo = H + fh - 1, W + fw - 1
    Hp, Wp = H + 2 * (fh - 1), W + 2 * (fw - 1)
    B = N * C

    # Lane-dense layout: every (n, c) plane gets its own lane (same filter for
    # all planes).  Wrapper-side transpose/reshape is layout plumbing only.
    xt = jnp.transpose(x, (2, 3, 0, 1)).reshape(H, W, B)   # [H, W, N*C]

    # Pre-flip + flatten the filter for the gather formulation; a 1-D SMEM
    # array of fh*fw words instead of a padded 2-D SMEM tile.
    filt_flipped = jnp.flip(filt, (0, 1)).reshape(fh * fw)

    # Per-lane VMEM footprint (bytes): double-buffered in/out blocks, the halo
    # scratch and the (compiler-managed) accumulator.
    per_lane = 4 * (2 * H * W + 3 * Ho * Wo + Hp * Wp)
    Bblk = _pick_lane_block(B, per_lane)
    grid = (pl.cdiv(B, Bblk),)

    kernel = _make_splat_kernel(fh, fw, H, W, Ho, Wo)

    out_t = pl.pallas_call(
        kernel,
        out_shape=jax.ShapeDtypeStruct((Ho, Wo, B), jnp.float32),
        grid_spec=pltpu.PrefetchScalarGridSpec(
            num_scalar_prefetch=0,
            grid=grid,
            in_specs=[
                pl.BlockSpec(memory_space=pltpu.MemorySpace.SMEM),   # filter
                pl.BlockSpec((H, W, Bblk), lambda b: (0, 0, b)),
            ],
            out_specs=pl.BlockSpec((Ho, Wo, Bblk), lambda b: (0, 0, b)),
            scratch_shapes=[pltpu.VMEM((Hp, Wp, Bblk), jnp.float32)],
        ),
        compiler_params=pltpu.CompilerParams(
            dimension_semantics=("parallel",)),
    )(filt_flipped, xt)

    # Back to NCHW to preserve the module's output layout.
    return jnp.transpose(out_t.reshape(Ho, Wo, N, C), (2, 3, 0, 1))


def splatter_reference(x, filt):
    """Independent pure-JAX reference using the scatter formulation."""
    N, C, H, W = x.shape
    fh, fw = filt.shape
    out = jnp.zeros((N, C, H + fh - 1, W + fw - 1), x.dtype)
    for di in range(fh):
        for dj in range(fw):
            out = out.at[:, :, di:di + H, dj:dj + W].add(x * filt[di, dj])
    return out


if __name__ == "__main__":
    key = jax.random.PRNGKey(0)
    k_x, k_f, k_b = jax.random.split(key, 3)

    # Module params: Parameter(torch.randn(filter_width, filter_height)),
    # Parameter(torch.randn(1, 1)).  The module names the dims
    # (filter_width, filter_height); we consume filt.shape as
    # (rows -> H, cols -> W).  The test filter is square, so the mapping is
    # unambiguous here.
    filter_width, filter_height = 3, 3
    filt = jax.random.normal(k_f, (filter_width, filter_height), jnp.float32)
    bias = jax.random.normal(k_b, (1, 1), jnp.float32)
    # TODO(synk): bias is a module parameter but is never added in the
    # reference forward pass, so it is intentionally not applied here.

    x = jax.random.normal(k_x, (2, 4, 16, 16), jnp.float32)

    fwd = jax.jit(splatter_forward)
    out = jax.block_until_ready(fwd(x, filt))

    ref = splatter_reference(x, filt)
    assert out.shape == (2, 4, 16 + filt.shape[0] - 1, 16 + filt.shape[1] - 1)
    assert jnp.allclose(out, ref, atol=1e-5, rtol=1e-5), "mismatch vs reference"

    print("KERNEL_OK")
</pallas_src>

<mosaic_0001>
module attributes {stable_mosaic.version = 11 : i64} {
  func.func @kernel(%arg0: i32, %arg1: memref<9xf32, #tpu.memory_space<smem>>, %arg2: memref<16x16x8xf32, #tpu.memory_space<vmem>>, %arg3: memref<18x18x8xf32, #tpu.memory_space<vmem>>, %arg4: memref<20x20x8xf32, #tpu.memory_space<vmem>>) attributes {dimension_semantics = [#tpu.dimension_semantics<parallel>], iteration_bounds = array<i64: 1>, scalar_prefetch = 0 : i64, scratch_operands = 1 : i64, tpu.core_type = #tpu.core_type<tc>, window_params = [{transform_indices = @transform_0, window_bounds = array<i64: 9>}, {transform_indices = @transform_1, window_bounds = array<i64: 16, 16, 8>}, {transform_indices = @transform_2, window_bounds = array<i64: 18, 18, 8>}]} {
    %cst = arith.constant 0.000000e+00 : f32
    %0 = vector.broadcast %cst : f32 to vector<20x20x8xf32>
    %c0 = arith.constant 0 : index
    %c0_0 = arith.constant 0 : index
    %c0_1 = arith.constant 0 : index
    %1 = vector.load %arg4[%c0, %c0_0, %c0_1] : memref<20x20x8xf32, #tpu.memory_space<vmem>>, vector<20x20x8xf32>
    tpu.vector_store %arg4[%c0, %c0_0, %c0_1], %0 {strides = array<i32>} : memref<20x20x8xf32, #tpu.memory_space<vmem>>, vector<20x20x8xf32>,
    %c0_2 = arith.constant 0 : index
    %c0_3 = arith.constant 0 : index
    %c0_4 = arith.constant 0 : index
    %2 = vector.load %arg2[%c0_2, %c0_3, %c0_4] : memref<16x16x8xf32, #tpu.memory_space<vmem>>, vector<16x16x8xf32>
    %c2 = arith.constant 2 : index
    %c2_5 = arith.constant 2 : index
    %c0_6 = arith.constant 0 : index
    %3 = vector.load %arg4[%c2, %c2_5, %c0_6] : memref<20x20x8xf32, #tpu.memory_space<vmem>>, vector<16x16x8xf32>
    tpu.vector_store %arg4[%c2, %c2_5, %c0_6], %2 {strides = array<i32>} : memref<20x20x8xf32, #tpu.memory_space<vmem>>, vector<16x16x8xf32>,
    %cst_7 = arith.constant 0.000000e+00 : f32
    %4 = vector.broadcast %cst_7 : f32 to vector<18x18x8xf32>
    %c0_8 = arith.constant 0 : index
    %5 = memref.load %arg1[%c0_8] : memref<9xf32, #tpu.memory_space<smem>>
    %c0_9 = arith.constant 0 : index
    %c0_10 = arith.constant 0 : index
    %c0_11 = arith.constant 0 : index
    %6 = vector.load %arg4[%c0_9, %c0_10, %c0_11] : memref<20x20x8xf32, #tpu.memory_space<vmem>>, vector<18x18x8xf32>
    %7 = vector.broadcast %5 : f32 to vector<18x18x8xf32>
    %8 = arith.mulf %7, %6 : vector<18x18x8xf32>
    %9 = arith.addf %4, %8 : vector<18x18x8xf32>
    %c1 = arith.constant 1 : index
    %10 = memref.load %arg1[%c1] : memref<9xf32, #tpu.memory_space<smem>>
    %c0_12 = arith.constant 0 : index
    %c1_13 = arith.constant 1 : index
    %c0_14 = arith.constant 0 : index
    %11 = vector.load %arg4[%c0_12, %c1_13, %c0_14] : memref<20x20x8xf32, #tpu.memory_space<vmem>>, vector<18x18x8xf32>
    %12 = vector.broadcast %10 : f32 to vector<18x18x8xf32>
    %13 = arith.mulf %12, %11 : vector<18x18x8xf32>
    %14 = arith.addf %9, %13 : vector<18x18x8xf32>
    %c2_15 = arith.constant 2 : index
    %15 = memref.load %arg1[%c2_15] : memref<9xf32, #tpu.memory_space<smem>>
    %c0_16 = arith.constant 0 : index
    %c2_17 = arith.constant 2 : index
    %c0_18 = arith.constant 0 : index
    %16 = vector.load %arg4[%c0_16, %c2_17, %c0_18] : memref<20x20x8xf32, #tpu.memory_space<vmem>>, vector<18x18x8xf32>
    %17 = vector.broadcast %15 : f32 to vector<18x18x8xf32>
    %18 = arith.mulf %17, %16 : vector<18x18x8xf32>
    %19 = arith.addf %14, %18 : vector<18x18x8xf32>
    %c3 = arith.constant 3 : index
    %20 = memref.load %arg1[%c3] : memref<9xf32, #tpu.memory_space<smem>>
    %c1_19 = arith.constant 1 : index
    %c0_20 = arith.constant 0 : index
    %c0_21 = arith.constant 0 : index
    %21 = vector.load %arg4[%c1_19, %c0_20, %c0_21] : memref<20x20x8xf32, #tpu.memory_space<vmem>>, vector<18x18x8xf32>
    %22 = vector.broadcast %20 : f32 to vector<18x18x8xf32>
    %23 = arith.mulf %22, %21 : vector<18x18x8xf32>
    %24 = arith.addf %19, %23 : vector<18x18x8xf32>
    %c4 = arith.constant 4 : index
    %25 = memref.load %arg1[%c4] : memref<9xf32, #tpu.memory_space<smem>>
    %c1_22 = arith.constant 1 : index
    %c1_23 = arith.constant 1 : index
    %c0_24 = arith.constant 0 : index
    %26 = vector.load %arg4[%c1_22, %c1_23, %c0_24] : memref<20x20x8xf32, #tpu.memory_space<vmem>>, vector<18x18x8xf32>
    %27 = vector.broadcast %25 : f32 to vector<18x18x8xf32>
    %28 = arith.mulf %27, %26 : vector<18x18x8xf32>
    %29 = arith.addf %24, %28 : vector<18x18x8xf32>
    %c5 = arith.constant 5 : index
    %30 = memref.load %arg1[%c5] : memref<9xf32, #tpu.memory_space<smem>>
    %c1_25 = arith.constant 1 : index
    %c2_26 = arith.constant 2 : index
    %c0_27 = arith.constant 0 : index
    %31 = vector.load %arg4[%c1_25, %c2_26, %c0_27] : memref<20x20x8xf32, #tpu.memory_space<vmem>>, vector<18x18x8xf32>
    %32 = vector.broadcast %30 : f32 to vector<18x18x8xf32>
    %33 = arith.mulf %32, %31 : vector<18x18x8xf32>
    %34 = arith.addf %29, %33 : vector<18x18x8xf32>
    %c6 = arith.constant 6 : index
    %35 = memref.load %arg1[%c6] : memref<9xf32, #tpu.memory_space<smem>>
    %c2_28 = arith.constant 2 : index
    %c0_29 = arith.constant 0 : index
    %c0_30 = arith.constant 0 : index
    %36 = vector.load %arg4[%c2_28, %c0_29, %c0_30] : memref<20x20x8xf32, #tpu.memory_space<vmem>>, vector<18x18x8xf32>
    %37 = vector.broadcast %35 : f32 to vector<18x18x8xf32>
    %38 = arith.mulf %37, %36 : vector<18x18x8xf32>
    %39 = arith.addf %34, %38 : vector<18x18x8xf32>
    %c7 = arith.constant 7 : index
    %40 = memref.load %arg1[%c7] : memref<9xf32, #tpu.memory_space<smem>>
    %c2_31 = arith.constant 2 : index
    %c1_32 = arith.constant 1 : index
    %c0_33 = arith.constant 0 : index
    %41 = vector.load %arg4[%c2_31, %c1_32, %c0_33] : memref<20x20x8xf32, #tpu.memory_space<vmem>>, vector<18x18x8xf32>
    %42 = vector.broadcast %40 : f32 to vector<18x18x8xf32>
    %43 = arith.mulf %42, %41 : vector<18x18x8xf32>
    %44 = arith.addf %39, %43 : vector<18x18x8xf32>
    %c8 = arith.constant 8 : index
    %45 = memref.load %arg1[%c8] : memref<9xf32, #tpu.memory_space<smem>>
    %c2_34 = arith.constant 2 : index
    %c2_35 = arith.constant 2 : index
    %c0_36 = arith.constant 0 : index
    %46 = vector.load %arg4[%c2_34, %c2_35, %c0_36] : memref<20x20x8xf32, #tpu.memory_space<vmem>>, vector<18x18x8xf32>
    %47 = vector.broadcast %45 : f32 to vector<18x18x8xf32>
    %48 = arith.mulf %47, %46 : vector<18x18x8xf32>
    %49 = arith.addf %44, %48 : vector<18x18x8xf32>
    %c0_37 = arith.constant 0 : index
    %c0_38 = arith.constant 0 : index
    %c0_39 = arith.constant 0 : index
    %50 = vector.load %arg3[%c0_37, %c0_38, %c0_39] : memref<18x18x8xf32, #tpu.memory_space<vmem>>, vector<18x18x8xf32>
    tpu.vector_store %arg3[%c0_37, %c0_38, %c0_39], %49 {strides = array<i32>} : memref<18x18x8xf32, #tpu.memory_space<vmem>>, vector<18x18x8xf32>,
    return
  }
  func.func @transform_0(%arg0: i32) -> i32 {
    %c0_i32 = arith.constant 0 : i32
    %c0_i32_0 = arith.constant 0 : i32
    return %c0_i32 : i32
  }
  func.func @transform_1(%arg0: i32) -> (i32, i32, i32) {
    %c0_i32 = arith.constant 0 : i32
    %c0_i32_0 = arith.constant 0 : i32
    %c0_i32_1 = arith.constant 0 : i32
    return %c0_i32, %c0_i32_0, %arg0 : i32, i32, i32
  }
  func.func @transform_2(%arg0: i32) -> (i32, i32, i32) {
    %c0_i32 = arith.constant 0 : i32
    %c0_i32_0 = arith.constant 0 : i32
    %c0_i32_1 = arith.constant 0 : i32
    return %c0_i32, %c0_i32_0, %arg0 : i32, i32, i32
  }
}

</mosaic_0001>

<llo_original>
// kernel: splatter_forward.1
$region0: #{splatter_forward.1}
  #allocation0 [shape = 'u32[]', space=smem, size = 0x4, offset = 0x4, fixed_abs, tag = 'smem constant byte address 0x4 - core index']
  #allocation1 [shape = 'u32[144,128]{1,0:T(1,128)}', space=vmem, size = 0x12000, scoped, tag = 'internal scratch']
  #allocation2 [shape = 'f32[20,20,8]{2,1,0:T(8,128)}', space=vmem, size = 0x3c000, scoped, tag = 'scratch operand']
  %s0 = inlined_call_operand.vmem [shape: f32[9], index: 0, kind: input, shape index: {}]
  %s1 = inlined_call_operand.vmem [shape: f32[16,16,8], index: 1, kind: input, shape index: {}]
  %s2 = inlined_call_operand.vmem [shape: f32[18,18,8], index: 2, kind: output, shape index: {}]
  %s3 = sld [smem:[#allocation0]]
  $region22: #{splatter_forward.1} parent=0
    _
  %s5 = ssub.s32 1, %s3
  %s6 = scalar_select 0, %s5, %s3
  $region1: #{splatter_forward.1} parent=0
    #allocation3 [shape = 'u8[512]{0}', space=smem, size = 0x200, scoped, tag = 'input window, operand 0, single buffered']
    #allocation4 [shape = 's32[1]{0}', space=sflag, size = 0x4, scoped, tag = 'scoped memory for splatter_forward.1']
    %7 = vsyncpa [#allocation4], 0
    // Predicated region
    $region2: #{splatter_forward.1} parent=1 // pred_check
      _
    $region3: #{splatter_forward.1} parent=1 // pred_check_branch
      %9 = sbr.rel (0) target = $region5
    $region4: #{splatter_forward.1} parent=1 // pred_region
      %s11 = ssub.s32 16, 16
      %12 = vsyncadd [#allocation4], %s11
      %s14 = sshll.u32 %s0, 4
      %s15 = int_to_ptr.vmem [resolvable:$true] %s14
      %17 = dma.vmem_to_smem %s15, 16, [#allocation3], [#allocation4]
    $region5: #{splatter_forward.1} parent=1 // pred_fallthru
      _
    // Predicated region
    $region6: #{splatter_forward.1} parent=1 // pred_check
      _
    $region7: #{splatter_forward.1} parent=1 // pred_check_branch
      %19 = sbr.rel (0) target = $region9
    $region8: #{splatter_forward.1} parent=1 // pred_region
      _
    $region9: #{splatter_forward.1} parent=1 // pred_fallthru
      _
    // Predicated region
    $region10: #{splatter_forward.1} parent=1 // pred_check
      _
    $region11: #{splatter_forward.1} parent=1 // pred_check_branch
      %21 = sbr.rel (0) target = $region13
    $region12: #{splatter_forward.1} parent=1 // pred_region
      %22 = dma.done [#allocation4], 16
    $region13: #{splatter_forward.1} parent=1 // pred_fallthru
      _
    %23 = sfence
    %vm24 = vcmask 64512
    %25 = vst.msk [vmem:[#allocation2] sm:$0xff] %vm24, 0.0
    %26 = vst.msk [vmem:[#allocation2 + $0x8] sm:$0xff] %vm24, 0.0
    %vm27 = vcmask 60416
    %28 = vst.msk [vmem:[#allocation2 + $0x10] sm:$0xf] %vm27, 0.0
    %29 = vst.msk [vmem:[#allocation2 + $0x18] sm:$0xff] %vm24, 0.0
    %30 = vst.msk [vmem:[#allocation2 + $0x20] sm:$0xff] %vm24, 0.0
    %31 = vst.msk [vmem:[#allocation2 + $0x28] sm:$0xf] %vm27, 0.0
    %32 = vst.msk [vmem:[#allocation2 + $0x30] sm:$0xff] %vm24, 0.0
    %33 = vst.msk [vmem:[#allocation2 + $0x38] sm:$0xff] %vm24, 0.0
    %34 = vst.msk [vmem:[#allocation2 + $0x40] sm:$0xf] %vm27, 0.0
    %35 = vst.msk [vmem:[#allocation2 + $0x48] sm:$0xff] %vm24, 0.0
    %36 = vst.msk [vmem:[#allocation2 + $0x50] sm:$0xff] %vm24, 0.0
    %37 = vst.msk [vmem:[#allocation2 + $0x58] sm:$0xf] %vm27, 0.0
    %38 = vst.msk [vmem:[#allocation2 + $0x60] sm:$0xff] %vm24, 0.0
    %39 = vst.msk [vmem:[#allocation2 + $0x68] sm:$0xff] %vm24, 0.0
    %40 = vst.msk [vmem:[#allocation2 + $0x70] sm:$0xf] %vm27, 0.0
    %41 = vst.msk [vmem:[#allocation2 + $0x78] sm:$0xff] %vm24, 0.0
    %42 = vst.msk [vmem:[#allocation2 + $0x80] sm:$0xff] %vm24, 0.0
    %43 = vst.msk [vmem:[#allocation2 + $0x88] sm:$0xf] %vm27, 0.0
    %44 = vst.msk [vmem:[#allocation2 + $0x90] sm:$0xff] %vm24, 0.0
    %45 = vst.msk [vmem:[#allocation2 + $0x98] sm:$0xff] %vm24, 0.0
    %46 = vst.msk [vmem:[#allocation2 + $0xa0] sm:$0xf] %vm27, 0.0
    %47 = vst.msk [vmem:[#allocation2 + $0xa8] sm:$0xff] %vm24, 0.0
    %48 = vst.msk [vmem:[#allocation2 + $0xb0] sm:$0xff] %vm24, 0.0
    %49 = vst.msk [vmem:[#allocation2 + $0xb8] sm:$0xf] %vm27, 0.0
    %50 = vst.msk [vmem:[#allocation2 + $0xc0] sm:$0xff] %vm24, 0.0
    %51 = vst.msk [vmem:[#allocation2 + $0xc8] sm:$0xff] %vm24, 0.0
    %52 = vst.msk [vmem:[#allocation2 + $0xd0] sm:$0xf] %vm27, 0.0
    %53 = vst.msk [vmem:[#allocation2 + $0xd8] sm:$0xff] %vm24, 0.0
    %54 = vst.msk [vmem:[#allocation2 + $0xe0] sm:$0xff] %vm24, 0.0
    %55 = vst.msk [vmem:[#allocation2 + $0xe8] sm:$0xf] %vm27, 0.0
    %56 = vst.msk [vmem:[#allocation2 + $0xf0] sm:$0xff] %vm24, 0.0
    %57 = vst.msk [vmem:[#allocation2 + $0xf8] sm:$0xff] %vm24, 0.0
    %58 = vst.msk [vmem:[#allocation2 + $0x100] sm:$0xf] %vm27, 0.0
    %59 = vst.msk [vmem:[#allocation2 + $0x108] sm:$0xff] %vm24, 0.0
    %60 = vst.msk [vmem:[#allocation2 + $0x110] sm:$0xff] %vm24, 0.0
    %61 = vst.msk [vmem:[#allocation2 + $0x118] sm:$0xf] %vm27, 0.0
    %62 = vst.msk [vmem:[#allocation2 + $0x120] sm:$0xff] %vm24, 0.0
    %63 = vst.msk [vmem:[#allocation2 + $0x128] sm:$0xff] %vm24, 0.0
    %64 = vst.msk [vmem:[#allocation2 + $0x130] sm:$0xf] %vm27, 0.0
    %65 = vst.msk [vmem:[#allocation2 + $0x138] sm:$0xff] %vm24, 0.0
    %66 = vst.msk [vmem:[#allocation2 + $0x140] sm:$0xff] %vm24, 0.0
    %67 = vst.msk [vmem:[#allocation2 + $0x148] sm:$0xf] %vm27, 0.0
    %68 = vst.msk [vmem:[#allocation2 + $0x150] sm:$0xff] %vm24, 0.0
    %69 = vst.msk [vmem:[#allocation2 + $0x158] sm:$0xff] %vm24, 0.0
    %70 = vst.msk [vmem:[#allocation2 + $0x160] sm:$0xf] %vm27, 0.0
    %71 = vst.msk [vmem:[#allocation2 + $0x168] sm:$0xff] %vm24, 0.0
    %72 = vst.msk [vmem:[#allocation2 + $0x170] sm:$0xff] %vm24, 0.0
    %73 = vst.msk [vmem:[#allocation2 + $0x178] sm:$0xf] %vm27, 0.0
    %74 = vst.msk [vmem:[#allocation2 + $0x180] sm:$0xff] %vm24, 0.0
    %75 = vst.msk [vmem:[#allocation2 + $0x188] sm:$0xff] %vm24, 0.0
    %76 = vst.msk [vmem:[#allocation2 + $0x190] sm:$0xf] %vm27, 0.0
    %77 = vst.msk [vmem:[#allocation2 + $0x198] sm:$0xff] %vm24, 0.0
    %78 = vst.msk [vmem:[#allocation2 + $0x1a0] sm:$0xff] %vm24, 0.0
    %79 = vst.msk [vmem:[#allocation2 + $0x1a8] sm:$0xf] %vm27, 0.0
    %80 = vst.msk [vmem:[#allocation2 + $0x1b0] sm:$0xff] %vm24, 0.0
    %81 = vst.msk [vmem:[#allocation2 + $0x1b8] sm:$0xff] %vm24, 0.0
    %82 = vst.msk [vmem:[#allocation2 + $0x1c0] sm:$0xf] %vm27, 0.0
    %83 = vst.msk [vmem:[#allocation2 + $0x1c8] sm:$0xff] %vm24, 0.0
    %84 = vst.msk [vmem:[#allocation2 + $0x1d0] sm:$0xff] %vm24, 0.0
    %85 = vst.msk [vmem:[#allocation2 + $0x1d8] sm:$0xf] %vm27, 0.0
    %v86 = vld [vmem:[%s1] sm:$0xff]
    %v87 = vld [vmem:[%s1 + $0x8] sm:$0xff]
    %v88 = vld [vmem:[%s1 + $0x10] sm:$0xff]
    %v89 = vld [vmem:[%s1 + $0x18] sm:$0xff]
    %v90 = vld [vmem:[%s1 + $0x20] sm:$0xff]
    %v91 = vld [vmem:[%s1 + $0x28] sm:$0xff]
    %v92 = vld [vmem:[%s1 + $0x30] sm:$0xff]
    %v93 = vld [vmem:[%s1 + $0x38] sm:$0xff]
    %v94 = vld [vmem:[%s1 + $0x40] sm:$0xff]
    %v95 = vld [vmem:[%s1 + $0x48] sm:$0xff]
    %v96 = vld [vmem:[%s1 + $0x50] sm:$0xff]
    %v97 = vld [vmem:[%s1 + $0x58] sm:$0xff]
    %v98 = vld [vmem:[%s1 + $0x60] sm:$0xff]
    %v99 = vld [vmem:[%s1 + $0x68] sm:$0xff]
    %v100 = vld [vmem:[%s1 + $0x70] sm:$0xff]
    %v101 = vld [vmem:[%s1 + $0x78] sm:$0xff]
    %v102 = vld [vmem:[%s1 + $0x80] sm:$0xff]
    %v103 = vld [vmem:[%s1 + $0x88] sm:$0xff]
    %v104 = vld [vmem:[%s1 + $0x90] sm:$0xff]
    %v105 = vld [vmem:[%s1 + $0x98] sm:$0xff]
    %v106 = vld [vmem:[%s1 + $0xa0] sm:$0xff]
    %v107 = vld [vmem:[%s1 + $0xa8] sm:$0xff]
    %v108 = vld [vmem:[%s1 + $0xb0] sm:$0xff]
    %v109 = vld [vmem:[%s1 + $0xb8] sm:$0xff]
    %v110 = vld [vmem:[%s1 + $0xc0] sm:$0xff]
    %v111 = vld [vmem:[%s1 + $0xc8] sm:$0xff]
    %v112 = vld [vmem:[%s1 + $0xd0] sm:$0xff]
    %v113 = vld [vmem:[%s1 + $0xd8] sm:$0xff]
    %v114 = vld [vmem:[%s1 + $0xe0] sm:$0xff]
    %v115 = vld [vmem:[%s1 + $0xe8] sm:$0xff]
    %v116 = vld [vmem:[%s1 + $0xf0] sm:$0xff]
    %v117 = vld [vmem:[%s1 + $0xf8] sm:$0xff]
    %s118 = scalar_lea.vmem [#allocation2], 48
    %119 = vst.msk [vmem:[%s118 + $0x2] sm:$0xff] %vm24, %v86
    %120 = vst.msk [vmem:[%s118 + $0xa] sm:$0xff] %vm24, %v87
    %121 = vst.msk [vmem:[%s118 + $0x1a] sm:$0xff] %vm24, %v88
    %122 = vst.msk [vmem:[%s118 + $0x22] sm:$0xff] %vm24, %v89
    %123 = vst.msk [vmem:[%s118 + $0x32] sm:$0xff] %vm24, %v90
    %124 = vst.msk [vmem:[%s118 + $0x3a] sm:$0xff] %vm24, %v91
    %125 = vst.msk [vmem:[%s118 + $0x4a] sm:$0xff] %vm24, %v92
    %126 = vst.msk [vmem:[%s118 + $0x52] sm:$0xff] %vm24, %v93
    %127 = vst.msk [vmem:[%s118 + $0x62] sm:$0xff] %vm24, %v94
    %128 = vst.msk [vmem:[%s118 + $0x6a] sm:$0xff] %vm24, %v95
    %129 = vst.msk [vmem:[%s118 + $0x7a] sm:$0xff] %vm24, %v96
    %130 = vst.msk [vmem:[%s118 + $0x82] sm:$0xff] %vm24, %v97
    %131 = vst.msk [vmem:[%s118 + $0x92] sm:$0xff] %vm24, %v98
    %132 = vst.msk [vmem:[%s118 + $0x9a] sm:$0xff] %vm24, %v99
    %133 = vst.msk [vmem:[%s118 + $0xaa] sm:$0xff] %vm24, %v100
    %134 = vst.msk [vmem:[%s118 + $0xb2] sm:$0xff] %vm24, %v101
    %135 = vst.msk [vmem:[%s118 + $0xc2] sm:$0xff] %vm24, %v102
    %136 = vst.msk [vmem:[%s118 + $0xca] sm:$0xff] %vm24, %v103
    %137 = vst.msk [vmem:[%s118 + $0xda] sm:$0xff] %vm24, %v104
    %138 = vst.msk [vmem:[%s118 + $0xe2] sm:$0xff] %vm24, %v105
    %139 = vst.msk [vmem:[%s118 + $0xf2] sm:$0xff] %vm24, %v106
    %140 = vst.msk [vmem:[%s118 + $0xfa] sm:$0xff] %vm24, %v107
    %141 = vst.msk [vmem:[%s118 + $0x10a] sm:$0xff] %vm24, %v108
    %142 = vst.msk [vmem:[%s118 + $0x112] sm:$0xff] %vm24, %v109
    %143 = vst.msk [vmem:[%s118 + $0x122] sm:$0xff] %vm24, %v110
    %144 = vst.msk [vmem:[%s118 + $0x12a] sm:$0xff] %vm24, %v111
    %145 = vst.msk [vmem:[%s118 + $0x13a] sm:$0xff] %vm24, %v112
    %146 = vst.msk [vmem:[%s118 + $0x142] sm:$0xff] %vm24, %v113
    %147 = vst.msk [vmem:[%s118 + $0x152] sm:$0xff] %vm24, %v114
    %148 = vst.msk [vmem:[%s118 + $0x15a] sm:$0xff] %vm24, %v115
    %149 = vst.msk [vmem:[%s118 + $0x16a] sm:$0xff] %vm24, %v116
    %150 = vst.msk [vmem:[%s118 + $0x172] sm:$0xff] %vm24, %v117
    %s151 = sld [smem:[#allocation3]]
    %v152 = vld [vmem:[#allocation2] sm:$0xff]
    %v153 = vld [vmem:[#allocation2 + $0x8] sm:$0xff]
    %v154 = vld [vmem:[#allocation2 + $0x10] sm:$0x3]
    %v155 = vld [vmem:[#allocation2 + $0x18] sm:$0xff]
    %v156 = vld [vmem:[#allocation2 + $0x20] sm:$0xff]
    %v157 = vld [vmem:[#allocation2 + $0x28] sm:$0x3]
    %v158 = vld [vmem:[#allocation2 + $0x30] sm:$0xff]
    %v159 = vld [vmem:[#allocation2 + $0x38] sm:$0xff]
    %v160 = vld [vmem:[#allocation2 + $0x40] sm:$0x3]
    %v161 = vld [vmem:[#allocation2 + $0x48] sm:$0xff]
    %v162 = vld [vmem:[#allocation2 + $0x50] sm:$0xff]
    %v163 = vld [vmem:[#allocation2 + $0x58] sm:$0x3]
    %v164 = vld [vmem:[#allocation2 + $0x60] sm:$0xff]
    %v165 = vld [vmem:[#allocation2 + $0x68] sm:$0xff]
    %v166 = vld [vmem:[#allocation2 + $0x70] sm:$0x3]
    %v167 = vld [vmem:[#allocation2 + $0x78] sm:$0xff]
    %v168 = vld [vmem:[#allocation2 + $0x80] sm:$0xff]
    %v169 = vld [vmem:[#allocation2 + $0x88] sm:$0x3]
    %v170 = vld [vmem:[#allocation2 + $0x90] sm:$0xff]
    %v171 = vld [vmem:[#allocation2 + $0x98] sm:$0xff]
    %v172 = vld [vmem:[#allocation2 + $0xa0] sm:$0x3]
    %v173 = vld [vmem:[#allocation2 + $0xa8] sm:$0xff]
    %v174 = vld [vmem:[#allocation2 + $0xb0] sm:$0xff]
    %v175 = vld [vmem:[#allocation2 + $0xb8] sm:$0x3]
    %v176 = vld [vmem:[#allocation2 + $0xc0] sm:$0xff]
    %v177 = vld [vmem:[#allocation2 + $0xc8] sm:$0xff]
    %v178 = vld [vmem:[#allocation2 + $0xd0] sm:$0x3]
    %v179 = vld [vmem:[#allocation2 + $0xd8] sm:$0xff]
    %v180 = vld [vmem:[#allocation2 + $0xe0] sm:$0xff]
    %v181 = vld [vmem:[#allocation2 + $0xe8] sm:$0x3]
    %v182 = vld [vmem:[#allocation2 + $0xf0] sm:$0xff]
    %v183 = vld [vmem:[#allocation2 + $0xf8] sm:$0xff]
    %v184 = vld [vmem:[#allocation2 + $0x100] sm:$0x3]
    %v185 = vld [vmem:[#allocation2 + $0x108] sm:$0xff]
    %v186 = vld [vmem:[#allocation2 + $0x110] sm:$0xff]
    %v187 = vld [vmem:[#allocation2 + $0x118] sm:$0x3]
    %v188 = vld [vmem:[#allocation2 + $0x120] sm:$0xff]
    %v189 = vld [vmem:[#allocation2 + $0x128] sm:$0xff]
    %v190 = vld [vmem:[#allocation2 + $0x130] sm:$0x3]
    %v191 = vld [vmem:[#allocation2 + $0x138] sm:$0xff]
    %v192 = vld [vmem:[#allocation2 + $0x140] sm:$0xff]
    %v193 = vld [vmem:[#allocation2 + $0x148] sm:$0x3]
    %v194 = vld [vmem:[#allocation2 + $0x150] sm:$0xff]
    %v195 = vld [vmem:[#allocation2 + $0x158] sm:$0xff]
    %v196 = vld [vmem:[#allocation2 + $0x160] sm:$0x3]
    %v197 = vld [vmem:[#allocation2 + $0x168] sm:$0xff]
    %v198 = vld [vmem:[#allocation2 + $0x170] sm:$0xff]
    %v199 = vld [vmem:[#allocation2 + $0x178] sm:$0x3]
    %v200 = vld [vmem:[#allocation2 + $0x180] sm:$0xff]
    %v201 = vld [vmem:[#allocation2 + $0x188] sm:$0xff]
    %v202 = vld [vmem:[#allocation2 + $0x190] sm:$0x3]
    %v203 = vld [vmem:[#allocation2 + $0x198] sm:$0xff]
    %v204 = vld [vmem:[#allocation2 + $0x1a0] sm:$0xff]
    %v205 = vld [vmem:[#allocation2 + $0x1a8] sm:$0x3]
    %v206 = vstv %s151
    %v207 = vmul.f32 %v206, %v152
    %v208 = vmul.f32 %v206, %v153
    %v209 = vmul.f32 %v206, %v154
    %v210 = vmul.f32 %v206, %v155
    %v211 = vmul.f32 %v206, %v156
    %v212 = vmul.f32 %v206, %v157
    %v213 = vmul.f32 %v206, %v158
    %v214 = vmul.f32 %v206, %v159
    %v215 = vmul.f32 %v206, %v160
    %v216 = vmul.f32 %v206, %v161
    %v217 = vmul.f32 %v206, %v162
    %v218 = vmul.f32 %v206, %v163
    %v219 = vmul.f32 %v206, %v164
    %v220 = vmul.f32 %v206, %v165
    %v221 = vmul.f32 %v206, %v166
    %v222 = vmul.f32 %v206, %v167
    %v223 = vmul.f32 %v206, %v168
    %v224 = vmul.f32 %v206, %v169
    %v225 = vmul.f32 %v206, %v170
    %v226 = vmul.f32 %v206, %v171
    %v227 = vmul.f32 %v206, %v172
    %v228 = vmul.f32 %v206, %v173
    %v229 = vmul.f32 %v206, %v174
    %v230 = vmul.f32 %v206, %v175
    %v231 = vmul.f32 %v206, %v176
    %v232 = vmul.f32 %v206, %v177
    %v233 = vmul.f32 %v206, %v178
    %v234 = vmul.f32 %v206, %v179
    %v235 = vmul.f32 %v206, %v180
    %v236 = vmul.f32 %v206, %v181
    %v237 = vmul.f32 %v206, %v182
    %v238 = vmul.f32 %v206, %v183
    %v239 = vmul.f32 %v206, %v184
    %v240 = vmul.f32 %v206, %v185
    %v241 = vmul.f32 %v206, %v186
    %v242 = vmul.f32 %v206, %v187
    %v243 = vmul.f32 %v206, %v188
    %v244 = vmul.f32 %v206, %v189
    %v245 = vmul.f32 %v206, %v190
    %v246 = vmul.f32 %v206, %v191
    %v247 = vmul.f32 %v206, %v192
    %v248 = vmul.f32 %v206, %v193
    %v249 = vmul.f32 %v206, %v194
    %v250 = vmul.f32 %v206, %v195
    %v251 = vmul.f32 %v206, %v196
    %v252 = vmul.f32 %v206, %v197
    %v253 = vmul.f32 %v206, %v198
    %v254 = vmul.f32 %v206, %v199
    %v255 = vmul.f32 %v206, %v200
    %v256 = vmul.f32 %v206, %v201
    %v257 = vmul.f32 %v206, %v202
    %v258 = vmul.f32 %v206, %v203
    %v259 = vmul.f32 %v206, %v204
    %v260 = vmul.f32 %v206, %v205
    %v261 = vadd.f32 %v207, 0.0
    %v262 = vadd.f32 %v208, 0.0
    %v263 = vadd.f32 %v209, 0.0
    %v264 = vadd.f32 %v210, 0.0
    %v265 = vadd.f32 %v211, 0.0
    %v266 = vadd.f32 %v212, 0.0
    %v267 = vadd.f32 %v213, 0.0
    %v268 = vadd.f32 %v214, 0.0
    %v269 = vadd.f32 %v215, 0.0
    %v270 = vadd.f32 %v216, 0.0
    %v271 = vadd.f32 %v217, 0.0
    %v272 = vadd.f32 %v218, 0.0
    %v273 = vadd.f32 %v219, 0.0
    %v274 = vadd.f32 %v220, 0.0
    %v275 = vadd.f32 %v221, 0.0
    %v276 = vadd.f32 %v222, 0.0
    %v277 = vadd.f32 %v223, 0.0
    %v278 = vadd.f32 %v224, 0.0
    %v279 = vadd.f32 %v225, 0.0
    %v280 = vadd.f32 %v226, 0.0
    %v281 = vadd.f32 %v227, 0.0
    %v282 = vadd.f32 %v228, 0.0
    %v283 = vadd.f32 %v229, 0.0
    %v284 = vadd.f32 %v230, 0.0
    %v285 = vadd.f32 %v231, 0.0
    %v286 = vadd.f32 %v232, 0.0
    %v287 = vadd.f32 %v233, 0.0
    %v288 = vadd.f32 %v234, 0.0
    %v289 = vadd.f32 %v235, 0.0
    %v290 = vadd.f32 %v236, 0.0
    %v291 = vadd.f32 %v237, 0.0
    %v292 = vadd.f32 %v238, 0.0
    %v293 = vadd.f32 %v239, 0.0
    %v294 = vadd.f32 %v240, 0.0
    %v295 = vadd.f32 %v241, 0.0
    %v296 = vadd.f32 %v242, 0.0
    %v297 = vadd.f32 %v243, 0.0
    %v298 = vadd.f32 %v244, 0.0
    %v299 = vadd.f32 %v245, 0.0
    %v300 = vadd.f32 %v246, 0.0
    %v301 = vadd.f32 %v247, 0.0
    %v302 = vadd.f32 %v248, 0.0
    %v303 = vadd.f32 %v249, 0.0
    %v304 = vadd.f32 %v250, 0.0
    %v305 = vadd.f32 %v251, 0.0
    %v306 = vadd.f32 %v252, 0.0
    %v307 = vadd.f32 %v253, 0.0
    %v308 = vadd.f32 %v254, 0.0
    %v309 = vadd.f32 %v255, 0.0
    %v310 = vadd.f32 %v256, 0.0
    %v311 = vadd.f32 %v257, 0.0
    %v312 = vadd.f32 %v258, 0.0
    %v313 = vadd.f32 %v259, 0.0
    %v314 = vadd.f32 %v260, 0.0
    %s315 = sld [smem:[#allocation3 + $0x1]]
    %v316 = vld [vmem:[#allocation2 + $0x1] sm:$0xff]
    %v317 = vld [vmem:[#allocation2 + $0x9] sm:$0xff]
    %v318 = vld [vmem:[#allocation2 + $0x11] sm:$0x3]
    %v319 = vld [vmem:[#allocation2 + $0x19] sm:$0xff]
    %v320 = vld [vmem:[#allocation2 + $0x21] sm:$0xff]
    %v321 = vld [vmem:[#allocation2 + $0x29] sm:$0x3]
    %v322 = vld [vmem:[#allocation2 + $0x31] sm:$0xff]
    %v323 = vld [vmem:[#allocation2 + $0x39] sm:$0xff]
    %v324 = vld [vmem:[#allocation2 + $0x41] sm:$0x3]
    %v325 = vld [vmem:[#allocation2 + $0x49] sm:$0xff]
    %v326 = vld [vmem:[#allocation2 + $0x51] sm:$0xff]
    %v327 = vld [vmem:[#allocation2 + $0x59] sm:$0x3]
    %v328 = vld [vmem:[#allocation2 + $0x61] sm:$0xff]
    %v329 = vld [vmem:[#allocation2 + $0x69] sm:$0xff]
    %v330 = vld [vmem:[#allocation2 + $0x71] sm:$0x3]
    %v331 = vld [vmem:[#allocation2 + $0x79] sm:$0xff]
    %v332 = vld [vmem:[#allocation2 + $0x81] sm:$0xff]
    %v333 = vld [vmem:[#allocation2 + $0x89] sm:$0x3]
    %v334 = vld [vmem:[#allocation2 + $0x91] sm:$0xff]
    %v335 = vld [vmem:[#allocation2 + $0x99] sm:$0xff]
    %v336 = vld [vmem:[#allocation2 + $0xa1] sm:$0x3]
    %v337 = vld [vmem:[#allocation2 + $0xa9] sm:$0xff]
    %v338 = vld [vmem:[#allocation2 + $0xb1] sm:$0xff]
    %v339 = vld [vmem:[#allocation2 + $0xb9] sm:$0x3]
    %v340 = vld [vmem:[#allocation2 + $0xc1] sm:$0xff]
    %v341 = vld [vmem:[#allocation2 + $0xc9] sm:$0xff]
    %v342 = vld [vmem:[#allocation2 + $0xd1] sm:$0x3]
    %v343 = vld [vmem:[#allocation2 + $0xd9] sm:$0xff]
    %v344 = vld [vmem:[#allocation2 + $0xe1] sm:$0xff]
    %v345 = vld [vmem:[#allocation2 + $0xe9] sm:$0x3]
    %v346 = vld [vmem:[#allocation2 + $0xf1] sm:$0xff]
    %v347 = vld [vmem:[#allocation2 + $0xf9] sm:$0xff]
    %v348 = vld [vmem:[#allocation2 + $0x101] sm:$0x3]
    %v349 = vld [vmem:[#allocation2 + $0x109] sm:$0xff]
    %v350 = vld [vmem:[#allocation2 + $0x111] sm:$0xff]
    %v351 = vld [vmem:[#allocation2 + $0x119] sm:$0x3]
    %v352 = vld [vmem:[#allocation2 + $0x121] sm:$0xff]
    %v353 = vld [vmem:[#allocation2 + $0x129] sm:$0xff]
    %v354 = vld [vmem:[#allocation2 + $0x131] sm:$0x3]
    %v355 = vld [vmem:[#allocation2 + $0x139] sm:$0xff]
    %v356 = vld [vmem:[#allocation2 + $0x141] sm:$0xff]
    %v357 = vld [vmem:[#allocation2 + $0x149] sm:$0x3]
    %v358 = vld [vmem:[#allocation2 + $0x151] sm:$0xff]
    %v359 = vld [vmem:[#allocation2 + $0x159] sm:$0xff]
    %v360 = vld [vmem:[#allocation2 + $0x161] sm:$0x3]
    %v361 = vld [vmem:[#allocation2 + $0x169] sm:$0xff]
    %v362 = vld [vmem:[#allocation2 + $0x171] sm:$0xff]
    %v363 = vld [vmem:[#allocation2 + $0x179] sm:$0x3]
    %v364 = vld [vmem:[#allocation2 + $0x181] sm:$0xff]
    %v365 = vld [vmem:[#allocation2 + $0x189] sm:$0xff]
    %v366 = vld [vmem:[#allocation2 + $0x191] sm:$0x3]
    %v367 = vld [vmem:[#allocation2 + $0x199] sm:$0xff]
    %v368 = vld [vmem:[#allocation2 + $0x1a1] sm:$0xff]
    %v369 = vld [vmem:[#allocation2 + $0x1a9] sm:$0x3]
    %v370 = vstv %s315
    %v371 = vmul.f32 %v370, %v316
    %v372 = vmul.f32 %v370, %v317
    %v373 = vmul.f32 %v370, %v318
    %v374 = vmul.f32 %v370, %v319
    %v375 = vmul.f32 %v370, %v320
    %v376 = vmul.f32 %v370, %v321
    %v377 = vmul.f32 %v370, %v322
    %v378 = vmul.f32 %v370, %v323
    %v379 = vmul.f32 %v370, %v324
    %v380 = vmul.f32 %v370, %v325
    %v381 = vmul.f32 %v370, %v326
    %v382 = vmul.f32 %v370, %v327
    %v383 = vmul.f32 %v370, %v328
    %v384 = vmul.f32 %v370, %v329
    %v385 = vmul.f32 %v370, %v330
    %v386 = vmul.f32 %v370, %v331
    %v387 = vmul.f32 %v370, %v332
    %v388 = vmul.f32 %v370, %v333
    %v389 = vmul.f32 %v370, %v334
    %v390 = vmul.f32 %v370, %v335
    %v391 = vmul.f32 %v370, %v336
    %v392 = vmul.f32 %v370, %v337
    %v393 = vmul.f32 %v370, %v338
    %v394 = vmul.f32 %v370, %v339
    %v395 = vmul.f32 %v370, %v340
    %v396 = vmul.f32 %v370, %v341
    %v397 = vmul.f32 %v370, %v342
    %v398 = vmul.f32 %v370, %v343
    %v399 = vmul.f32 %v370, %v344
    %v400 = vmul.f32 %v370, %v345
    %v401 = vmul.f32 %v370, %v346
    %v402 = vmul.f32 %v370, %v347
    %v403 = vmul.f32 %v370, %v348
    %v404 = vmul.f32 %v370, %v349
    %v405 = vmul.f32 %v370, %v350
    %v406 = vmul.f32 %v370, %v351
    %v407 = vmul.f32 %v370, %v352
    %v408 = vmul.f32 %v370, %v353
    %v409 = vmul.f32 %v370, %v354
    %v410 = vmul.f32 %v370, %v355
    %v411 = vmul.f32 %v370, %v356
    %v412 = vmul.f32 %v370, %v357
    %v413 = vmul.f32 %v370, %v358
    %v414 = vmul.f32 %v370, %v359
    %v415 = vmul.f32 %v370, %v360
    %v416 = vmul.f32 %v370, %v361
    %v417 = vmul.f32 %v370, %v362
    %v418 = vmul.f32 %v370, %v363
    %v419 = vmul.f32 %v370, %v364
    %v420 = vmul.f32 %v370, %v365
    %v421 = vmul.f32 %v370, %v366
    %v422 = vmul.f32 %v370, %v367
    %v423 = vmul.f32 %v370, %v368
    %v424 = vmul.f32 %v370, %v369
    %v425 = vadd.f32 %v261, %v371
    %v426 = vadd.f32 %v262, %v372
    %v427 = vadd.f32 %v263, %v373
    %v428 = vadd.f32 %v264, %v374
    %v429 = vadd.f32 %v265, %v375
    %v430 = vadd.f32 %v266, %v376
    %v431 = vadd.f32 %v267, %v377
    %v432 = vadd.f32 %v268, %v378
    %v433 = vadd.f32 %v269, %v379
    %v434 = vadd.f32 %v270, %v380
    %v435 = vadd.f32 %v271, %v381
    %v436 = vadd.f32 %v272, %v382
    %v437 = vadd.f32 %v273, %v383
    %v438 = vadd.f32 %v274, %v384
    %v439 = vadd.f32 %v275, %v385
    %v440 = vadd.f32 %v276, %v386
    %v441 = vadd.f32 %v277, %v387
    %v442 = vadd.f32 %v278, %v388
    %v443 = vadd.f32 %v279, %v389
    %v444 = vadd.f32 %v280, %v390
    %v445 = vadd.f32 %v281, %v391
    %v446 = vadd.f32 %v282, %v392
    %v447 = vadd.f32 %v283, %v393
    %v448 = vadd.f32 %v284, %v394
    %v449 = vadd.f32 %v285, %v395
    %v450 = vadd.f32 %v286, %v396
    %v451 = vadd.f32 %v287, %v397
    %v452 = vadd.f32 %v288, %v398
    %v453 = vadd.f32 %v289, %v399
    %v454 = vadd.f32 %v290, %v400
    %v455 = vadd.f32 %v291, %v401
    %v456 = vadd.f32 %v292, %v402
    %v457 = vadd.f32 %v293, %v403
    %v458 = vadd.f32 %v294, %v404
    %v459 = vadd.f32 %v295, %v405
    %v460 = vadd.f32 %v296, %v406
    %v461 = vadd.f32 %v297, %v407
    %v462 = vadd.f32 %v298, %v408
    %v463 = vadd.f32 %v299, %v409
    %v464 = vadd.f32 %v300, %v410
    %v465 = vadd.f32 %v301, %v411
    %v466 = vadd.f32 %v302, %v412
    %v467 = vadd.f32 %v303, %v413
    %v468 = vadd.f32 %v304, %v414
    %v469 = vadd.f32 %v305, %v415
    %v470 = vadd.f32 %v306, %v416
    %v471 = vadd.f32 %v307, %v417
    %v472 = vadd.f32 %v308, %v418
    %v473 = vadd.f32 %v309, %v419
    %v474 = vadd.f32 %v310, %v420
    %v475 = vadd.f32 %v311, %v421
    %v476 = vadd.f32 %v312, %v422
    %v477 = vadd.f32 %v313, %v423
    %v478 = vadd.f32 %v314, %v424
    %s479 = sld [smem:[#allocation3 + $0x2]]
    %v480 = vld [vmem:[#allocation2 + $0x2] sm:$0xff]
    %v481 = vld [vmem:[#allocation2 + $0xa] sm:$0xff]
    %v482 = vld [vmem:[#allocation2 + $0x12] sm:$0x3]
    %v483 = vld [vmem:[#allocation2 + $0x1a] sm:$0xff]
    %v484 = vld [vmem:[#allocation2 + $0x22] sm:$0xff]
    %v485 = vld [vmem:[#allocation2 + $0x2a] sm:$0x3]
    %v486 = vld [vmem:[#allocation2 + $0x32] sm:$0xff]
    %v487 = vld [vmem:[#allocation2 + $0x3a] sm:$0xff]
    %v488 = vld [vmem:[#allocation2 + $0x42] sm:$0x3]
    %v489 = vld [vmem:[#allocation2 + $0x4a] sm:$0xff]
    %v490 = vld [vmem:[#allocation2 + $0x52] sm:$0xff]
    %v491 = vld [vmem:[#allocation2 + $0x5a] sm:$0x3]
    %v492 = vld [vmem:[#allocation2 + $0x62] sm:$0xff]
    %v493 = vld [vmem:[#allocation2 + $0x6a] sm:$0xff]
    %v494 = vld [vmem:[#allocation2 + $0x72] sm:$0x3]
    %v495 = vld [vmem:[#allocation2 + $0x7a] sm:$0xff]
    %v496 = vld [vmem:[#allocation2 + $0x82] sm:$0xff]
    %v497 = vld [vmem:[#allocation2 + $0x8a] sm:$0x3]
    %v498 = vld [vmem:[#allocation2 + $0x92] sm:$0xff]
    %v499 = vld [vmem:[#allocation2 + $0x9a] sm:$0xff]
    %v500 = vld [vmem:[#allocation2 + $0xa2] sm:$0x3]
    %v501 = vld [vmem:[#allocation2 + $0xaa] sm:$0xff]
    %v502 = vld [vmem:[#allocation2 + $0xb2] sm:$0xff]
    %v503 = vld [vmem:[#allocation2 + $0xba] sm:$0x3]
    %v504 = vld [vmem:[#allocation2 + $0xc2] sm:$0xff]
    %v505 = vld [vmem:[#allocation2 + $0xca] sm:$0xff]
    %v506 = vld [vmem:[#allocation2 + $0xd2] sm:$0x3]
    %v507 = vld [vmem:[#allocation2 + $0xda] sm:$0xff]
    %v508 = vld [vmem:[#allocation2 + $0xe2] sm:$0xff]
    %v509 = vld [vmem:[#allocation2 + $0xea] sm:$0x3]
    %v510 = vld [vmem:[#allocation2 + $0xf2] sm:$0xff]
    %v511 = vld [vmem:[#allocation2 + $0xfa] sm:$0xff]
    %v512 = vld [vmem:[#allocation2 + $0x102] sm:$0x3]
    %v513 = vld [vmem:[#allocation2 + $0x10a] sm:$0xff]
    %v514 = vld [vmem:[#allocation2 + $0x112] sm:$0xff]
    %v515 = vld [vmem:[#allocation2 + $0x11a] sm:$0x3]
    %v516 = vld [vmem:[#allocation2 + $0x122] sm:$0xff]
    %v517 = vld [vmem:[#allocation2 + $0x12a] sm:$0xff]
    %v518 = vld [vmem:[#allocation2 + $0x132] sm:$0x3]
    %v519 = vld [vmem:[#allocation2 + $0x13a] sm:$0xff]
    %v520 = vld [vmem:[#allocation2 + $0x142] sm:$0xff]
    %v521 = vld [vmem:[#allocation2 + $0x14a] sm:$0x3]
    %v522 = vld [vmem:[#allocation2 + $0x152] sm:$0xff]
    %v523 = vld [vmem:[#allocation2 + $0x15a] sm:$0xff]
    %v524 = vld [vmem:[#allocation2 + $0x162] sm:$0x3]
    %v525 = vld [vmem:[#allocation2 + $0x16a] sm:$0xff]
    %v526 = vld [vmem:[#allocation2 + $0x172] sm:$0xff]
    %v527 = vld [vmem:[#allocation2 + $0x17a] sm:$0x3]
    %v528 = vld [vmem:[#allocation2 + $0x182] sm:$0xff]
    %v529 = vld [vmem:[#allocation2 + $0x18a] sm:$0xff]
    %v530 = vld [vmem:[#allocation2 + $0x192] sm:$0x3]
    %v531 = vld [vmem:[#allocation2 + $0x19a] sm:$0xff]
    %v532 = vld [vmem:[#allocation2 + $0x1a2] sm:$0xff]
    %v533 = vld [vmem:[#allocation2 + $0x1aa] sm:$0x3]
    %v534 = vstv %s479
    %v535 = vmul.f32 %v534, %v480
    %v536 = vmul.f32 %v534, %v481
    %v537 = vmul.f32 %v534, %v482
    %v538 = vmul.f32 %v534, %v483
    %v539 = vmul.f32 %v534, %v484
    %v540 = vmul.f32 %v534, %v485
    %v541 = vmul.f32 %v534, %v486
    %v542 = vmul.f32 %v534, %v487
    %v543 = vmul.f32 %v534, %v488
    %v544 = vmul.f32 %v534, %v489
    %v545 = vmul.f32 %v534, %v490
    %v546 = vmul.f32 %v534, %v491
    %v547 = vmul.f32 %v534, %v492
    %v548 = vmul.f32 %v534, %v493
    %v549 = vmul.f32 %v534, %v494
    %v550 = vmul.f32 %v534, %v495
    %v551 = vmul.f32 %v534, %v496
    %v552 = vmul.f32 %v534, %v497
    %v553 = vmul.f32 %v534, %v498
    %v554 = vmul.f32 %v534, %v499
    %v555 = vmul.f32 %v534, %v500
    %v556 = vmul.f32 %v534, %v501
    %v557 = vmul.f32 %v534, %v502
    %v558 = vmul.f32 %v534, %v503
    %v559 = vmul.f32 %v534, %v504
    %v560 = vmul.f32 %v534, %v505
    %v561 = vmul.f32 %v534, %v506
    %v562 = vmul.f32 %v534, %v507
    %v563 = vmul.f32 %v534, %v508
    %v564 = vmul.f32 %v534, %v509
    %v565 = vmul.f32 %v534, %v510
    %v566 = vmul.f32 %v534, %v511
    %v567 = vmul.f32 %v534, %v512
    %v568 = vmul.f32 %v534, %v513
    %v569 = vmul.f32 %v534, %v514
    %v570 = vmul.f32 %v534, %v515
    %v571 = vmul.f32 %v534, %v516
    %v572 = vmul.f32 %v534, %v517
    %v573 = vmul.f32 %v534, %v518
    %v574 = vmul.f32 %v534, %v519
    %v575 = vmul.f32 %v534, %v520
    %v576 = vmul.f32 %v534, %v521
    %v577 = vmul.f32 %v534, %v522
    %v578 = vmul.f32 %v534, %v523
    %v579 = vmul.f32 %v534, %v524
    %v580 = vmul.f32 %v534, %v525
    %v581 = vmul.f32 %v534, %v526
    %v582 = vmul.f32 %v534, %v527
    %v583 = vmul.f32 %v534, %v528
    %v584 = vmul.f32 %v534, %v529
    %v585 = vmul.f32 %v534, %v530
    %v586 = vmul.f32 %v534, %v531
    %v587 = vmul.f32 %v534, %v532
    %v588 = vmul.f32 %v534, %v533
    %v589 = vadd.f32 %v425, %v535
    %v590 = vadd.f32 %v426, %v536
    %v591 = vadd.f32 %v427, %v537
    %v592 = vadd.f32 %v428, %v538
    %v593 = vadd.f32 %v429, %v539
    %v594 = vadd.f32 %v430, %v540
    %v595 = vadd.f32 %v431, %v541
    %v596 = vadd.f32 %v432, %v542
    %v597 = vadd.f32 %v433, %v543
    %v598 = vadd.f32 %v434, %v544
    %v599 = vadd.f32 %v435, %v545
    %v600 = vadd.f32 %v436, %v546
    %v601 = vadd.f32 %v437, %v547
    %v602 = vadd.f32 %v438, %v548
    %v603 = vadd.f32 %v439, %v549
    %v604 = vadd.f32 %v440, %v550
    %v605 = vadd.f32 %v441, %v551
    %v606 = vadd.f32 %v442, %v552
    %v607 = vadd.f32 %v443, %v553
    %v608 = vadd.f32 %v444, %v554
    %v609 = vadd.f32 %v445, %v555
    %v610 = vadd.f32 %v446, %v556
    %v611 = vadd.f32 %v447, %v557
    %v612 = vadd.f32 %v448, %v558
    %v613 = vadd.f32 %v449, %v559
    %v614 = vadd.f32 %v450, %v560
    %v615 = vadd.f32 %v451, %v561
    %v616 = vadd.f32 %v452, %v562
    %v617 = vadd.f32 %v453, %v563
    %v618 = vadd.f32 %v454, %v564
    %v619 = vadd.f32 %v455, %v565
    %v620 = vadd.f32 %v456, %v566
    %v621 = vadd.f32 %v457, %v567
    %v622 = vadd.f32 %v458, %v568
    %v623 = vadd.f32 %v459, %v569
    %v624 = vadd.f32 %v460, %v570
    %v625 = vadd.f32 %v461, %v571
    %v626 = vadd.f32 %v462, %v572
    %v627 = vadd.f32 %v463, %v573
    %v628 = vadd.f32 %v464, %v574
    %v629 = vadd.f32 %v465, %v575
    %v630 = vadd.f32 %v466, %v576
    %v631 = vadd.f32 %v467, %v577
    %v632 = vadd.f32 %v468, %v578
    %v633 = vadd.f32 %v469, %v579
    %v634 = vadd.f32 %v470, %v580
    %v635 = vadd.f32 %v471, %v581
    %v636 = vadd.f32 %v472, %v582
    %v637 = vadd.f32 %v473, %v583
    %v638 = vadd.f32 %v474, %v584
    %v639 = vadd.f32 %v475, %v585
    %v640 = vadd.f32 %v476, %v586
    %v641 = vadd.f32 %v477, %v587
    %v642 = vadd.f32 %v478, %v588
    %s643 = sld [smem:[#allocation3 + $0x3]]
    %s644 = scalar_lea.vmem [#allocation2], 24
    %v645 = vld [vmem:[%s644] sm:$0xff]
    %v646 = vld [vmem:[%s644 + $0x8] sm:$0xff]
    %v647 = vld [vmem:[%s644 + $0x10] sm:$0x3]
    %v648 = vld [vmem:[%s644 + $0x18] sm:$0xff]
    %v649 = vld [vmem:[%s644 + $0x20] sm:$0xff]
    %v650 = vld [vmem:[%s644 + $0x28] sm:$0x3]
    %v651 = vld [vmem:[%s644 + $0x30] sm:$0xff]
    %v652 = vld [vmem:[%s644 + $0x38] sm:$0xff]
    %v653 = vld [vmem:[%s644 + $0x40] sm:$0x3]
    %v654 = vld [vmem:[%s644 + $0x48] sm:$0xff]
    %v655 = vld [vmem:[%s644 + $0x50] sm:$0xff]
    %v656 = vld [vmem:[%s644 + $0x58] sm:$0x3]
    %v657 = vld [vmem:[%s644 + $0x60] sm:$0xff]
    %v658 = vld [vmem:[%s644 + $0x68] sm:$0xff]
    %v659 = vld [vmem:[%s644 + $0x70] sm:$0x3]
    %v660 = vld [vmem:[%s644 + $0x78] sm:$0xff]
    %v661 = vld [vmem:[%s644 + $0x80] sm:$0xff]
    %v662 = vld [vmem:[%s644 + $0x88] sm:$0x3]
    %v663 = vld [vmem:[%s644 + $0x90] sm:$0xff]
    %v664 = vld [vmem:[%s644 + $0x98] sm:$0xff]
    %v665 = vld [vmem:[%s644 + $0xa0] sm:$0x3]
    %v666 = vld [vmem:[%s644 + $0xa8] sm:$0xff]
    %v667 = vld [vmem:[%s644 + $0xb0] sm:$0xff]
    %v668 = vld [vmem:[%s644 + $0xb8] sm:$0x3]
    %v669 = vld [vmem:[%s644 + $0xc0] sm:$0xff]
    %v670 = vld [vmem:[%s644 + $0xc8] sm:$0xff]
    %v671 = vld [vmem:[%s644 + $0xd0] sm:$0x3]
    %v672 = vld [vmem:[%s644 + $0xd8] sm:$0xff]
    %v673 = vld [vmem:[%s644 + $0xe0] sm:$0xff]
    %v674 = vld [vmem:[%s644 + $0xe8] sm:$0x3]
    %v675 = vld [vmem:[%s644 + $0xf0] sm:$0xff]
    %v676 = vld [vmem:[%s644 + $0xf8] sm:$0xff]
    %v677 = vld [vmem:[%s644 + $0x100] sm:$0x3]
    %v678 = vld [vmem:[%s644 + $0x108] sm:$0xff]
    %v679 = vld [vmem:[%s644 + $0x110] sm:$0xff]
    %v680 = vld [vmem:[%s644 + $0x118] sm:$0x3]
    %v681 = vld [vmem:[%s644 + $0x120] sm:$0xff]
    %v682 = vld [vmem:[%s644 + $0x128] sm:$0xff]
    %v683 = vld [vmem:[%s644 + $0x130] sm:$0x3]
    %v684 = vld [vmem:[%s644 + $0x138] sm:$0xff]
    %v685 = vld [vmem:[%s644 + $0x140] sm:$0xff]
    %v686 = vld [vmem:[%s644 + $0x148] sm:$0x3]
    %v687 = vld [vmem:[%s644 + $0x150] sm:$0xff]
    %v688 = vld [vmem:[%s644 + $0x158] sm:$0xff]
    %v689 = vld [vmem:[%s644 + $0x160] sm:$0x3]
    %v690 = vld [vmem:[%s644 + $0x168] sm:$0xff]
    %v691 = vld [vmem:[%s644 + $0x170] sm:$0xff]
    %v692 = vld [vmem:[%s644 + $0x178] sm:$0x3]
    %v693 = vld [vmem:[%s644 + $0x180] sm:$0xff]
    %v694 = vld [vmem:[%s644 + $0x188] sm:$0xff]
    %v695 = vld [vmem:[%s644 + $0x190] sm:$0x3]
    %v696 = vld [vmem:[%s644 + $0x198] sm:$0xff]
    %v697 = vld [vmem:[%s644 + $0x1a0] sm:$0xff]
    %v698 = vld [vmem:[%s644 + $0x1a8] sm:$0x3]
    %v699 = vstv %s643
    %v700 = vmul.f32 %v699, %v645
    %v701 = vmul.f32 %v699, %v646
    %v702 = vmul.f32 %v699, %v647
    %v703 = vmul.f32 %v699, %v648
    %v704 = vmul.f32 %v699, %v649
    %v705 = vmul.f32 %v699, %v650
    %v706 = vmul.f32 %v699, %v651
    %v707 = vmul.f32 %v699, %v652
    %v708 = vmul.f32 %v699, %v653
    %v709 = vmul.f32 %v699, %v654
    %v710 = vmul.f32 %v699, %v655
    %v711 = vmul.f32 %v699, %v656
    %v712 = vmul.f32 %v699, %v657
    %v713 = vmul.f32 %v699, %v658
    %v714 = vmul.f32 %v699, %v659
    %v715 = vmul.f32 %v699, %v660
    %v716 = vmul.f32 %v699, %v661
    %v717 = vmul.f32 %v699, %v662
    %v718 = vmul.f32 %v699, %v663
    %v719 = vmul.f32 %v699, %v664
    %v720 = vmul.f32 %v699, %v665
    %v721 = vmul.f32 %v699, %v666
    %v722 = vmul.f32 %v699, %v667
    %v723 = vmul.f32 %v699, %v668
    %v724 = vmul.f32 %v699, %v669
    %v725 = vmul.f32 %v699, %v670
    %v726 = vmul.f32 %v699, %v671
    %v727 = vmul.f32 %v699, %v672
    %v728 = vmul.f32 %v699, %v673
    %v729 = vmul.f32 %v699, %v674
    %v730 = vmul.f32 %v699, %v675
    %v731 = vmul.f32 %v699, %v676
    %v732 = vmul.f32 %v699, %v677
    %v733 = vmul.f32 %v699, %v678
    %v734 = vmul.f32 %v699, %v679
    %v735 = vmul.f32 %v699, %v680
    %v736 = vmul.f32 %v699, %v681
    %v737 = vmul.f32 %v699, %v682
    %v738 = vmul.f32 %v699, %v683
    %v739 = vmul.f32 %v699, %v684
    %v740 = vmul.f32 %v699, %v685
    %v741 = vmul.f32 %v699, %v686
    %v742 = vmul.f32 %v699, %v687
    %v743 = vmul.f32 %v699, %v688
    %v744 = vmul.f32 %v699, %v689
    %v745 = vmul.f32 %v699, %v690
    %v746 = vmul.f32 %v699, %v691
    %v747 = vmul.f32 %v699, %v692
    %v748 = vmul.f32 %v699, %v693
    %v749 = vmul.f32 %v699, %v694
    %v750 = vmul.f32 %v699, %v695
    %v751 = vmul.f32 %v699, %v696
    %v752 = vmul.f32 %v699, %v697
    %v753 = vmul.f32 %v699, %v698
    %v754 = vadd.f32 %v589, %v700
    %v755 = vadd.f32 %v590, %v701
    %v756 = vadd.f32 %v591, %v702
    %v757 = vadd.f32 %v592, %v703
    %v758 = vadd.f32 %v593, %v704
    %v759 = vadd.f32 %v594, %v705
    %v760 = vadd.f32 %v595, %v706
    %v761 = vadd.f32 %v596, %v707
    %v762 = vadd.f32 %v597, %v708
    %v763 = vadd.f32 %v598, %v709
    %v764 = vadd.f32 %v599, %v710
    %v765 = vadd.f32 %v600, %v711
    %v766 = vadd.f32 %v601, %v712
    %v767 = vadd.f32 %v602, %v713
    %v768 = vadd.f32 %v603, %v714
    %v769 = vadd.f32 %v604, %v715
    %v770 = vadd.f32 %v605, %v716
    %v771 = vadd.f32 %v606, %v717
    %v772 = vadd.f32 %v607, %v718
    %v773 = vadd.f32 %v608, %v719
    %v774 = vadd.f32 %v609, %v720
    %v775 = vadd.f32 %v610, %v721
    %v776 = vadd.f32 %v611, %v722
    %v777 = vadd.f32 %v612, %v723
    %v778 = vadd.f32 %v613, %v724
    %v779 = vadd.f32 %v614, %v725
    %v780 = vadd.f32 %v615, %v726
    %v781 = vadd.f32 %v616, %v727
    %v782 = vadd.f32 %v617, %v728
    %v783 = vadd.f32 %v618, %v729
    %v784 = vadd.f32 %v619, %v730
    %v785 = vadd.f32 %v620, %v731
    %v786 = vadd.f32 %v621, %v732
    %v787 = vadd.f32 %v622, %v733
    %v788 = vadd.f32 %v623, %v734
    %v789 = vadd.f32 %v624, %v735
    %v790 = vadd.f32 %v625, %v736
    %v791 = vadd.f32 %v626, %v737
    %v792 = vadd.f32 %v627, %v738
    %v793 = vadd.f32 %v628, %v739
    %v794 = vadd.f32 %v629, %v740
    %v795 = vadd.f32 %v630, %v741
    %v796 = vadd.f32 %v631, %v742
    %v797 = vadd.f32 %v632, %v743
    %v798 = vadd.f32 %v633, %v744
    %v799 = vadd.f32 %v634, %v745
    %v800 = vadd.f32 %v635, %v746
    %v801 = vadd.f32 %v636, %v747
    %v802 = vadd.f32 %v637, %v748
    %v803 = vadd.f32 %v638, %v749
    %v804 = vadd.f32 %v639, %v750
    %v805 = vadd.f32 %v640, %v751
    %v806 = vadd.f32 %v641, %v752
    %v807 = vadd.f32 %v642, %v753
    %s808 = sld [smem:[#allocation3 + $0x4]]
    %v809 = vld [vmem:[%s644 + $0x1] sm:$0xff]
    %v810 = vld [vmem:[%s644 + $0x9] sm:$0xff]
    %v811 = vld [vmem:[%s644 + $0x11] sm:$0x3]
    %v812 = vld [vmem:[%s644 + $0x19] sm:$0xff]
    %v813 = vld [vmem:[%s644 + $0x21] sm:$0xff]
    %v814 = vld [vmem:[%s644 + $0x29] sm:$0x3]
    %v815 = vld [vmem:[%s644 + $0x31] sm:$0xff]
    %v816 = vld [vmem:[%s644 + $0x39] sm:$0xff]
    %v817 = vld [vmem:[%s644 + $0x41] sm:$0x3]
    %v818 = vld [vmem:[%s644 + $0x49] sm:$0xff]
    %v819 = vld [vmem:[%s644 + $0x51] sm:$0xff]
    %v820 = vld [vmem:[%s644 + $0x59] sm:$0x3]
    %v821 = vld [vmem:[%s644 + $0x61] sm:$0xff]
    %v822 = vld [vmem:[%s644 + $0x69] sm:$0xff]
    %v823 = vld [vmem:[%s644 + $0x71] sm:$0x3]
    %v824 = vld [vmem:[%s644 + $0x79] sm:$0xff]
    %v825 = vld [vmem:[%s644 + $0x81] sm:$0xff]
    %v826 = vld [vmem:[%s644 + $0x89] sm:$0x3]
    %v827 = vld [vmem:[%s644 + $0x91] sm:$0xff]
    %v828 = vld [vmem:[%s644 + $0x99] sm:$0xff]
    %v829 = vld [vmem:[%s644 + $0xa1] sm:$0x3]
    %v830 = vld [vmem:[%s644 + $0xa9] sm:$0xff]
    %v831 = vld [vmem:[%s644 + $0xb1] sm:$0xff]
    %v832 = vld [vmem:[%s644 + $0xb9] sm:$0x3]
    %v833 = vld [vmem:[%s644 + $0xc1] sm:$0xff]
    %v834 = vld [vmem:[%s644 + $0xc9] sm:$0xff]
    %v835 = vld [vmem:[%s644 + $0xd1] sm:$0x3]
    %v836 = vld [vmem:[%s644 + $0xd9] sm:$0xff]
    %v837 = vld [vmem:[%s644 + $0xe1] sm:$0xff]
    %v838 = vld [vmem:[%s644 + $0xe9] sm:$0x3]
    %v839 = vld [vmem:[%s644 + $0xf1] sm:$0xff]
    %v840 = vld [vmem:[%s644 + $0xf9] sm:$0xff]
    %v841 = vld [vmem:[%s644 + $0x101] sm:$0x3]
    %v842 = vld [vmem:[%s644 + $0x109] sm:$0xff]
    %v843 = vld [vmem:[%s644 + $0x111] sm:$0xff]
    %v844 = vld [vmem:[%s644 + $0x119] sm:$0x3]
    %v845 = vld [vmem:[%s644 + $0x121] sm:$0xff]
    %v846 = vld [vmem:[%s644 + $0x129] sm:$0xff]
    %v847 = vld [vmem:[%s644 + $0x131] sm:$0x3]
    %v848 = vld [vmem:[%s644 + $0x139] sm:$0xff]
    %v849 = vld [vmem:[%s644 + $0x141] sm:$0xff]
    %v850 = vld [vmem:[%s644 + $0x149] sm:$0x3]
    %v851 = vld [vmem:[%s644 + $0x151] sm:$0xff]
    %v852 = vld [vmem:[%s644 + $0x159] sm:$0xff]
    %v853 = vld [vmem:[%s644 + $0x161] sm:$0x3]
    %v854 = vld [vmem:[%s644 + $0x169] sm:$0xff]
    %v855 = vld [vmem:[%s644 + $0x171] sm:$0xff]
    %v856 = vld [vmem:[%s644 + $0x179] sm:$0x3]
    %v857 = vld [vmem:[%s644 + $0x181] sm:$0xff]
    %v858 = vld [vmem:[%s644 + $0x189] sm:$0xff]
    %v859 = vld [vmem:[%s644 + $0x191] sm:$0x3]
    %v860 = vld [vmem:[%s644 + $0x199] sm:$0xff]
    %v861 = vld [vmem:[%s644 + $0x1a1] sm:$0xff]
    %v862 = vld [vmem:[%s644 + $0x1a9] sm:$0x3]
    %v863 = vstv %s808
    %v864 = vmul.f32 %v863, %v809
    %v865 = vmul.f32 %v863, %v810
    %v866 = vmul.f32 %v863, %v811
    %v867 = vmul.f32 %v863, %v812
    %v868 = vmul.f32 %v863, %v813
    %v869 = vmul.f32 %v863, %v814
    %v870 = vmul.f32 %v863, %v815
    %v871 = vmul.f32 %v863, %v816
    %v872 = vmul.f32 %v863, %v817
    %v873 = vmul.f32 %v863, %v818
    %v874 = vmul.f32 %v863, %v819
    %v875 = vmul.f32 %v863, %v820
    %v876 = vmul.f32 %v863, %v821
    %v877 = vmul.f32 %v863, %v822
    %v878 = vmul.f32 %v863, %v823
    %v879 = vmul.f32 %v863, %v824
    %v880 = vmul.f32 %v863, %v825
    %v881 = vmul.f32 %v863, %v826
    %v882 = vmul.f32 %v863, %v827
    %v883 = vmul.f32 %v863, %v828
    %v884 = vmul.f32 %v863, %v829
    %v885 = vmul.f32 %v863, %v830
    %v886 = vmul.f32 %v863, %v831
    %v887 = vmul.f32 %v863, %v832
    %v888 = vmul.f32 %v863, %v833
    %v889 = vmul.f32 %v863, %v834
    %v890 = vmul.f32 %v863, %v835
    %v891 = vmul.f32 %v863, %v836
    %v892 = vmul.f32 %v863, %v837
    %v893 = vmul.f32 %v863, %v838
    %v894 = vmul.f32 %v863, %v839
    %v895 = vmul.f32 %v863, %v840
    %v896 = vmul.f32 %v863, %v841
    %v897 = vmul.f32 %v863, %v842
    %v898 = vmul.f32 %v863, %v843
    %v899 = vmul.f32 %v863, %v844
    %v900 = vmul.f32 %v863, %v845
    %v901 = vmul.f32 %v863, %v846
    %v902 = vmul.f32 %v863, %v847
    %v903 = vmul.f32 %v863, %v848
    %v904 = vmul.f32 %v863, %v849
    %v905 = vmul.f32 %v863, %v850
    %v906 = vmul.f32 %v863, %v851
    %v907 = vmul.f32 %v863, %v852
    %v908 = vmul.f32 %v863, %v853
    %v909 = vmul.f32 %v863, %v854
    %v910 = vmul.f32 %v863, %v855
    %v911 = vmul.f32 %v863, %v856
    %v912 = vmul.f32 %v863, %v857
    %v913 = vmul.f32 %v863, %v858
    %v914 = vmul.f32 %v863, %v859
    %v915 = vmul.f32 %v863, %v860
    %v916 = vmul.f32 %v863, %v861
    %v917 = vmul.f32 %v863, %v862
    %v918 = vadd.f32 %v754, %v864
    %v919 = vadd.f32 %v755, %v865
    %v920 = vadd.f32 %v756, %v866
    %v921 = vadd.f32 %v757, %v867
    %v922 = vadd.f32 %v758, %v868
    %v923 = vadd.f32 %v759, %v869
    %v924 = vadd.f32 %v760, %v870
    %v925 = vadd.f32 %v761, %v871
    %v926 = vadd.f32 %v762, %v872
    %v927 = vadd.f32 %v763, %v873
    %v928 = vadd.f32 %v764, %v874
    %v929 = vadd.f32 %v765, %v875
    %v930 = vadd.f32 %v766, %v876
    %v931 = vadd.f32 %v767, %v877
    %v932 = vadd.f32 %v768, %v878
    %v933 = vadd.f32 %v769, %v879
    %v934 = vadd.f32 %v770, %v880
    %v935 = vadd.f32 %v771, %v881
    %v936 = vadd.f32 %v772, %v882
    %v937 = vadd.f32 %v773, %v883
    %v938 = vadd.f32 %v774, %v884
    %v939 = vadd.f32 %v775, %v885
    %v940 = vadd.f32 %v776, %v886
    %v941 = vadd.f32 %v777, %v887
    %v942 = vadd.f32 %v778, %v888
    %v943 = vadd.f32 %v779, %v889
    %v944 = vadd.f32 %v780, %v890
    %v945 = vadd.f32 %v781, %v891
    %v946 = vadd.f32 %v782, %v892
    %v947 = vadd.f32 %v783, %v893
    %v948 = vadd.f32 %v784, %v894
    %v949 = vadd.f32 %v785, %v895
    %v950 = vadd.f32 %v786, %v896
    %v951 = vadd.f32 %v787, %v897
    %v952 = vadd.f32 %v788, %v898
    %v953 = vadd.f32 %v789, %v899
    %v954 = vadd.f32 %v790, %v900
    %v955 = vadd.f32 %v791, %v901
    %v956 = vadd.f32 %v792, %v902
    %v957 = vadd.f32 %v793, %v903
    %v958 = vadd.f32 %v794, %v904
    %v959 = vadd.f32 %v795, %v905
    %v960 = vadd.f32 %v796, %v906
    %v961 = vadd.f32 %v797, %v907
    %v962 = vadd.f32 %v798, %v908
    %v963 = vadd.f32 %v799, %v909
    %v964 = vadd.f32 %v800, %v910
    %v965 = vadd.f32 %v801, %v911
    %v966 = vadd.f32 %v802, %v912
    %v967 = vadd.f32 %v803, %v913
    %v968 = vadd.f32 %v804, %v914
    %v969 = vadd.f32 %v805, %v915
    %v970 = vadd.f32 %v806, %v916
    %v971 = vadd.f32 %v807, %v917
    %s972 = sld [smem:[#allocation3 + $0x5]]
    %v973 = vld [vmem:[%s644 + $0x2] sm:$0xff]
    %v974 = vld [vmem:[%s644 + $0xa] sm:$0xff]
    %v975 = vld [vmem:[%s644 + $0x12] sm:$0x3]
    %v976 = vld [vmem:[%s644 + $0x1a] sm:$0xff]
    %v977 = vld [vmem:[%s644 + $0x22] sm:$0xff]
    %v978 = vld [vmem:[%s644 + $0x2a] sm:$0x3]
    %v979 = vld [vmem:[%s644 + $0x32] sm:$0xff]
    %v980 = vld [vmem:[%s644 + $0x3a] sm:$0xff]
    %v981 = vld [vmem:[%s644 + $0x42] sm:$0x3]
    %v982 = vld [vmem:[%s644 + $0x4a] sm:$0xff]
    %v983 = vld [vmem:[%s644 + $0x52] sm:$0xff]
    %v984 = vld [vmem:[%s644 + $0x5a] sm:$0x3]
    %v985 = vld [vmem:[%s644 + $0x62] sm:$0xff]
    %v986 = vld [vmem:[%s644 + $0x6a] sm:$0xff]
    %v987 = vld [vmem:[%s644 + $0x72] sm:$0x3]
    %v988 = vld [vmem:[%s644 + $0x7a] sm:$0xff]
    %v989 = vld [vmem:[%s644 + $0x82] sm:$0xff]
    %v990 = vld [vmem:[%s644 + $0x8a] sm:$0x3]
    %v991 = vld [vmem:[%s644 + $0x92] sm:$0xff]
    %v992 = vld [vmem:[%s644 + $0x9a] sm:$0xff]
    %v993 = vld [vmem:[%s644 + $0xa2] sm:$0x3]
    %v994 = vld [vmem:[%s644 + $0xaa] sm:$0xff]
    %v995 = vld [vmem:[%s644 + $0xb2] sm:$0xff]
    %v996 = vld [vmem:[%s644 + $0xba] sm:$0x3]
    %v997 = vld [vmem:[%s644 + $0xc2] sm:$0xff]
    %v998 = vld [vmem:[%s644 + $0xca] sm:$0xff]
    %v999 = vld [vmem:[%s644 + $0xd2] sm:$0x3]
    %v1000 = vld [vmem:[%s644 + $0xda] sm:$0xff]
    %v1001 = vld [vmem:[%s644 + $0xe2] sm:$0xff]
    %v1002 = vld [vmem:[%s644 + $0xea] sm:$0x3]
    %v1003 = vld [vmem:[%s644 + $0xf2] sm:$0xff]
    %v1004 = vld [vmem:[%s644 + $0xfa] sm:$0xff]
    %v1005 = vld [vmem:[%s644 + $0x102] sm:$0x3]
    %v1006 = vld [vmem:[%s644 + $0x10a] sm:$0xff]
    %v1007 = vld [vmem:[%s644 + $0x112] sm:$0xff]
    %v1008 = vld [vmem:[%s644 + $0x11a] sm:$0x3]
    %v1009 = vld [vmem:[%s644 + $0x122] sm:$0xff]
    %v1010 = vld [vmem:[%s644 + $0x12a] sm:$0xff]
    %v1011 = vld [vmem:[%s644 + $0x132] sm:$0x3]
    %v1012 = vld [vmem:[%s644 + $0x13a] sm:$0xff]
    %v1013 = vld [vmem:[%s644 + $0x142] sm:$0xff]
    %v1014 = vld [vmem:[%s644 + $0x14a] sm:$0x3]
    %v1015 = vld [vmem:[%s644 + $0x152] sm:$0xff]
    %v1016 = vld [vmem:[%s644 + $0x15a] sm:$0xff]
    %v1017 = vld [vmem:[%s644 + $0x162] sm:$0x3]
    %v1018 = vld [vmem:[%s644 + $0x16a] sm:$0xff]
    %v1019 = vld [vmem:[%s644 + $0x172] sm:$0xff]
    %v1020 = vld [vmem:[%s644 + $0x17a] sm:$0x3]
    %v1021 = vld [vmem:[%s644 + $0x182] sm:$0xff]
    %v1022 = vld [vmem:[%s644 + $0x18a] sm:$0xff]
    %v1023 = vld [vmem:[%s644 + $0x192] sm:$0x3]
    %v1024 = vld [vmem:[%s644 + $0x19a] sm:$0xff]
    %v1025 = vld [vmem:[%s644 + $0x1a2] sm:$0xff]
    %v1026 = vld [vmem:[%s644 + $0x1aa] sm:$0x3]
    %v1027 = vstv %s972
    %v1028 = vmul.f32 %v1027, %v973
    %v1029 = vmul.f32 %v1027, %v974
    %v1030 = vmul.f32 %v1027, %v975
    %v1031 = vmul.f32 %v1027, %v976
    %v1032 = vmul.f32 %v1027, %v977
    %v1033 = vmul.f32 %v1027, %v978
    %v1034 = vmul.f32 %v1027, %v979
    %v1035 = vmul.f32 %v1027, %v980
    %v1036 = vmul.f32 %v1027, %v981
    %v1037 = vmul.f32 %v1027, %v982
    %v1038 = vmul.f32 %v1027, %v983
    %v1039 = vmul.f32 %v1027, %v984
    %v1040 = vmul.f32 %v1027, %v985
    %v1041 = vmul.f32 %v1027, %v986
    %v1042 = vmul.f32 %v1027, %v987
    %v1043 = vmul.f32 %v1027, %v988
    %v1044 = vmul.f32 %v1027, %v989
    %v1045 = vmul.f32 %v1027, %v990
    %v1046 = vmul.f32 %v1027, %v991
    %v1047 = vmul.f32 %v1027, %v992
    %v1048 = vmul.f32 %v1027, %v993
    %v1049 = vmul.f32 %v1027, %v994
    %v1050 = vmul.f32 %v1027, %v995
    %v1051 = vmul.f32 %v1027, %v996
    %v1052 = vmul.f32 %v1027, %v997
    %v1053 = vmul.f32 %v1027, %v998
    %v1054 = vmul.f32 %v1027, %v999
    %v1055 = vmul.f32 %v1027, %v1000
    %v1056 = vmul.f32 %v1027, %v1001
    %v1057 = vmul.f32 %v1027, %v1002
    %v1058 = vmul.f32 %v1027, %v1003
    %v1059 = vmul.f32 %v1027, %v1004
    %v1060 = vmul.f32 %v1027, %v1005
    %v1061 = vmul.f32 %v1027, %v1006
    %v1062 = vmul.f32 %v1027, %v1007
    %v1063 = vmul.f32 %v1027, %v1008
    %v1064 = vmul.f32 %v1027, %v1009
    %v1065 = vmul.f32 %v1027, %v1010
    %v1066 = vmul.f32 %v1027, %v1011
    %v1067 = vmul.f32 %v1027, %v1012
    %v1068 = vmul.f32 %v1027, %v1013
    %v1069 = vmul.f32 %v1027, %v1014
    %v1070 = vmul.f32 %v1027, %v1015
    %v1071 = vmul.f32 %v1027, %v1016
    %v1072 = vmul.f32 %v1027, %v1017
    %v1073 = vmul.f32 %v1027, %v1018
    %v1074 = vmul.f32 %v1027, %v1019
    %v1075 = vmul.f32 %v1027, %v1020
    %v1076 = vmul.f32 %v1027, %v1021
    %v1077 = vmul.f32 %v1027, %v1022
    %v1078 = vmul.f32 %v1027, %v1023
    %v1079 = vmul.f32 %v1027, %v1024
    %v1080 = vmul.f32 %v1027, %v1025
    %v1081 = vmul.f32 %v1027, %v1026
    %v1082 = vadd.f32 %v918, %v1028
    %v1083 = vadd.f32 %v919, %v1029
    %v1084 = vadd.f32 %v920, %v1030
    %v1085 = vadd.f32 %v921, %v1031
    %v1086 = vadd.f32 %v922, %v1032
    %v1087 = vadd.f32 %v923, %v1033
    %v1088 = vadd.f32 %v924, %v1034
    %v1089 = vadd.f32 %v925, %v1035
    %v1090 = vadd.f32 %v926, %v1036
    %v1091 = vadd.f32 %v927, %v1037
    %v1092 = vadd.f32 %v928, %v1038
    %v1093 = vadd.f32 %v929, %v1039
    %v1094 = vadd.f32 %v930, %v1040
    %v1095 = vadd.f32 %v931, %v1041
    %v1096 = vadd.f32 %v932, %v1042
    %v1097 = vadd.f32 %v933, %v1043
    %v1098 = vadd.f32 %v934, %v1044
    %v1099 = vadd.f32 %v935, %v1045
    %v1100 = vadd.f32 %v936, %v1046
    %v1101 = vadd.f32 %v937, %v1047
    %v1102 = vadd.f32 %v938, %v1048
    %v1103 = vadd.f32 %v939, %v1049
    %v1104 = vadd.f32 %v940, %v1050
    %v1105 = vadd.f32 %v941, %v1051
    %v1106 = vadd.f32 %v942, %v1052
    %v1107 = vadd.f32 %v943, %v1053
    %v1108 = vadd.f32 %v944, %v1054
    %v1109 = vadd.f32 %v945, %v1055
    %v1110 = vadd.f32 %v946, %v1056
    %v1111 = vadd.f32 %v947, %v1057
    %v1112 = vadd.f32 %v948, %v1058
    %v1113 = vadd.f32 %v949, %v1059
    %v1114 = vadd.f32 %v950, %v1060
    %v1115 = vadd.f32 %v951, %v1061
    %v1116 = vadd.f32 %v952, %v1062
    %v1117 = vadd.f32 %v953, %v1063
    %v1118 = vadd.f32 %v954, %v1064
    %v1119 = vadd.f32 %v955, %v1065
    %v1120 = vadd.f32 %v956, %v1066
    %v1121 = vadd.f32 %v957, %v1067
    %v1122 = vadd.f32 %v958, %v1068
    %v1123 = vadd.f32 %v959, %v1069
    %v1124 = vadd.f32 %v960, %v1070
    %v1125 = vadd.f32 %v961, %v1071
    %v1126 = vadd.f32 %v962, %v1072
    %v1127 = vadd.f32 %v963, %v1073
    %v1128 = vadd.f32 %v964, %v1074
    %v1129 = vadd.f32 %v965, %v1075
    %v1130 = vadd.f32 %v966, %v1076
    %v1131 = vadd.f32 %v967, %v1077
    %v1132 = vadd.f32 %v968, %v1078
    %v1133 = vadd.f32 %v969, %v1079
    %v1134 = vadd.f32 %v970, %v1080
    %v1135 = vadd.f32 %v971, %v1081
    %s1136 = sld [smem:[#allocation3 + $0x6]]
    %v1137 = vld [vmem:[%s118] sm:$0xff]
    %v1138 = vld [vmem:[%s118 + $0x8] sm:$0xff]
    %v1139 = vld [vmem:[%s118 + $0x10] sm:$0x3]
    %v1140 = vld [vmem:[%s118 + $0x18] sm:$0xff]
    %v1141 = vld [vmem:[%s118 + $0x20] sm:$0xff]
    %v1142 = vld [vmem:[%s118 + $0x28] sm:$0x3]
    %v1143 = vld [vmem:[%s118 + $0x30] sm:$0xff]
    %v1144 = vld [vmem:[%s118 + $0x38] sm:$0xff]
    %v1145 = vld [vmem:[%s118 + $0x40] sm:$0x3]
    %v1146 = vld [vmem:[%s118 + $0x48] sm:$0xff]
    %v1147 = vld [vmem:[%s118 + $0x50] sm:$0xff]
    %v1148 = vld [vmem:[%s118 + $0x58] sm:$0x3]
    %v1149 = vld [vmem:[%s118 + $0x60] sm:$0xff]
    %v1150 = vld [vmem:[%s118 + $0x68] sm:$0xff]
    %v1151 = vld [vmem:[%s118 + $0x70] sm:$0x3]
    %v1152 = vld [vmem:[%s118 + $0x78] sm:$0xff]
    %v1153 = vld [vmem:[%s118 + $0x80] sm:$0xff]
    %v1154 = vld [vmem:[%s118 + $0x88] sm:$0x3]
    %v1155 = vld [vmem:[%s118 + $0x90] sm:$0xff]
    %v1156 = vld [vmem:[%s118 + $0x98] sm:$0xff]
    %v1157 = vld [vmem:[%s118 + $0xa0] sm:$0x3]
    %v1158 = vld [vmem:[%s118 + $0xa8] sm:$0xff]
    %v1159 = vld [vmem:[%s118 + $0xb0] sm:$0xff]
    %v1160 = vld [vmem:[%s118 + $0xb8] sm:$0x3]
    %v1161 = vld [vmem:[%s118 + $0xc0] sm:$0xff]
    %v1162 = vld [vmem:[%s118 + $0xc8] sm:$0xff]
    %v1163 = vld [vmem:[%s118 + $0xd0] sm:$0x3]
    %v1164 = vld [vmem:[%s118 + $0xd8] sm:$0xff]
    %v1165 = vld [vmem:[%s118 + $0xe0] sm:$0xff]
    %v1166 = vld [vmem:[%s118 + $0xe8] sm:$0x3]
    %v1167 = vld [vmem:[%s118 + $0xf0] sm:$0xff]
    %v1168 = vld [vmem:[%s118 + $0xf8] sm:$0xff]
    %v1169 = vld [vmem:[%s118 + $0x100] sm:$0x3]
    %v1170 = vld [vmem:[%s118 + $0x108] sm:$0xff]
    %v1171 = vld [vmem:[%s118 + $0x110] sm:$0xff]
    %v1172 = vld [vmem:[%s118 + $0x118] sm:$0x3]
    %v1173 = vld [vmem:[%s118 + $0x120] sm:$0xff]
    %v1174 = vld [vmem:[%s118 + $0x128] sm:$0xff]
    %v1175 = vld [vmem:[%s118 + $0x130] sm:$0x3]
    %v1176 = vld [vmem:[%s118 + $0x138] sm:$0xff]
    %v1177 = vld [vmem:[%s118 + $0x140] sm:$0xff]
    %v1178 = vld [vmem:[%s118 + $0x148] sm:$0x3]
    %v1179 = vld [vmem:[%s118 + $0x150] sm:$0xff]
    %v1180 = vld [vmem:[%s118 + $0x158] sm:$0xff]
    %v1181 = vld [vmem:[%s118 + $0x160] sm:$0x3]
    %v1182 = vld [vmem:[%s118 + $0x168] sm:$0xff]
    %v1183 = vld [vmem:[%s118 + $0x170] sm:$0xff]
    %v1184 = vld [vmem:[%s118 + $0x178] sm:$0x3]
    %v1185 = vld [vmem:[%s118 + $0x180] sm:$0xff]
    %v1186 = vld [vmem:[%s118 + $0x188] sm:$0xff]
    %v1187 = vld [vmem:[%s118 + $0x190] sm:$0x3]
    %v1188 = vld [vmem:[%s118 + $0x198] sm:$0xff]
    %v1189 = vld [vmem:[%s118 + $0x1a0] sm:$0xff]
    %v1190 = vld [vmem:[%s118 + $0x1a8] sm:$0x3]
    %v1191 = vstv %s1136
    %v1192 = vmul.f32 %v1191, %v1137
    %v1193 = vmul.f32 %v1191, %v1138
    %v1194 = vmul.f32 %v1191, %v1139
    %v1195 = vmul.f32 %v1191, %v1140
    %v1196 = vmul.f32 %v1191, %v1141
    %v1197 = vmul.f32 %v1191, %v1142
    %v1198 = vmul.f32 %v1191, %v1143
    %v1199 = vmul.f32 %v1191, %v1144
    %v1200 = vmul.f32 %v1191, %v1145
    %v1201 = vmul.f32 %v1191, %v1146
    %v1202 = vmul.f32 %v1191, %v1147
    %v1203 = vmul.f32 %v1191, %v1148
    %v1204 = vmul.f32 %v1191, %v1149
    %v1205 = vmul.f32 %v1191, %v1150
    %v1206 = vmul.f32 %v1191, %v1151
    %v1207 = vmul.f32 %v1191, %v1152
    %v1208 = vmul.f32 %v1191, %v1153
    %v1209 = vmul.f32 %v1191, %v1154
    %v1210 = vmul.f32 %v1191, %v1155
    %v1211 = vmul.f32 %v1191, %v1156
    %v1212 = vmul.f32 %v1191, %v1157
    %v1213 = vmul.f32 %v1191, %v1158
    %v1214 = vmul.f32 %v1191, %v1159
    %v1215 = vmul.f32 %v1191, %v1160
    %v1216 = vmul.f32 %v1191, %v1161
    %v1217 = vmul.f32 %v1191, %v1162
    %v1218 = vmul.f32 %v1191, %v1163
    %v1219 = vmul.f32 %v1191, %v1164
    %v1220 = vmul.f32 %v1191, %v1165
    %v1221 = vmul.f32 %v1191, %v1166
    %v1222 = vmul.f32 %v1191, %v1167
    %v1223 = vmul.f32 %v1191, %v1168
    %v1224 = vmul.f32 %v1191, %v1169
    %v1225 = vmul.f32 %v1191, %v1170
    %v1226 = vmul.f32 %v1191, %v1171
    %v1227 = vmul.f32 %v1191, %v1172
    %v1228 = vmul.f32 %v1191, %v1173
    %v1229 = vmul.f32 %v1191, %v1174
    %v1230 = vmul.f32 %v1191, %v1175
    %v1231 = vmul.f32 %v1191, %v1176
    %v1232 = vmul.f32 %v1191, %v1177
    %v1233 = vmul.f32 %v1191, %v1178
    %v1234 = vmul.f32 %v1191, %v1179
    %v1235 = vmul.f32 %v1191, %v1180
    %v1236 = vmul.f32 %v1191, %v1181
    %v1237 = vmul.f32 %v1191, %v1182
    %v1238 = vmul.f32 %v1191, %v1183
    %v1239 = vmul.f32 %v1191, %v1184
    %v1240 = vmul.f32 %v1191, %v1185
    %v1241 = vmul.f32 %v1191, %v1186
    %v1242 = vmul.f32 %v1191, %v1187
    %v1243 = vmul.f32 %v1191, %v1188
    %v1244 = vmul.f32 %v1191, %v1189
    %v1245 = vmul.f32 %v1191, %v1190
    %v1246 = vadd.f32 %v1082, %v1192
    %v1247 = vadd.f32 %v1083, %v1193
    %v1248 = vadd.f32 %v1084, %v1194
    %v1249 = vadd.f32 %v1085, %v1195
    %v1250 = vadd.f32 %v1086, %v1196
    %v1251 = vadd.f32 %v1087, %v1197
    %v1252 = vadd.f32 %v1088, %v1198
    %v1253 = vadd.f32 %v1089, %v1199
    %v1254 = vadd.f32 %v1090, %v1200
    %v1255 = vadd.f32 %v1091, %v1201
    %v1256 = vadd.f32 %v1092, %v1202
    %v1257 = vadd.f32 %v1093, %v1203
    %v1258 = vadd.f32 %v1094, %v1204
    %v1259 = vadd.f32 %v1095, %v1205
    %v1260 = vadd.f32 %v1096, %v1206
    %v1261 = vadd.f32 %v1097, %v1207
    %v1262 = vadd.f32 %v1098, %v1208
    %v1263 = vadd.f32 %v1099, %v1209
    %v1264 = vadd.f32 %v1100, %v1210
    %v1265 = vadd.f32 %v1101, %v1211
    %v1266 = vadd.f32 %v1102, %v1212
    %v1267 = vadd.f32 %v1103, %v1213
    %v1268 = vadd.f32 %v1104, %v1214
    %v1269 = vadd.f32 %v1105, %v1215
    %v1270 = vadd.f32 %v1106, %v1216
    %v1271 = vadd.f32 %v1107, %v1217
    %v1272 = vadd.f32 %v1108, %v1218
    %v1273 = vadd.f32 %v1109, %v1219
    %v1274 = vadd.f32 %v1110, %v1220
    %v1275 = vadd.f32 %v1111, %v1221
    %v1276 = vadd.f32 %v1112, %v1222
    %v1277 = vadd.f32 %v1113, %v1223
    %v1278 = vadd.f32 %v1114, %v1224
    %v1279 = vadd.f32 %v1115, %v1225
    %v1280 = vadd.f32 %v1116, %v1226
    %v1281 = vadd.f32 %v1117, %v1227
    %v1282 = vadd.f32 %v1118, %v1228
    %v1283 = vadd.f32 %v1119, %v1229
    %v1284 = vadd.f32 %v1120, %v1230
    %v1285 = vadd.f32 %v1121, %v1231
    %v1286 = vadd.f32 %v1122, %v1232
    %v1287 = vadd.f32 %v1123, %v1233
    %v1288 = vadd.f32 %v1124, %v1234
    %v1289 = vadd.f32 %v1125, %v1235
    %v1290 = vadd.f32 %v1126, %v1236
    %v1291 = vadd.f32 %v1127, %v1237
    %v1292 = vadd.f32 %v1128, %v1238
    %v1293 = vadd.f32 %v1129, %v1239
    %v1294 = vadd.f32 %v1130, %v1240
    %v1295 = vadd.f32 %v1131, %v1241
    %v1296 = vadd.f32 %v1132, %v1242
    %v1297 = vadd.f32 %v1133, %v1243
    %v1298 = vadd.f32 %v1134, %v1244
    %v1299 = vadd.f32 %v1135, %v1245
    %s1300 = sld [smem:[#allocation3 + $0x7]]
    %v1301 = vld [vmem:[%s118 + $0x1] sm:$0xff]
    %v1302 = vld [vmem:[%s118 + $0x9] sm:$0xff]
    %v1303 = vld [vmem:[%s118 + $0x11] sm:$0x3]
    %v1304 = vld [vmem:[%s118 + $0x19] sm:$0xff]
    %v1305 = vld [vmem:[%s118 + $0x21] sm:$0xff]
    %v1306 = vld [vmem:[%s118 + $0x29] sm:$0x3]
    %v1307 = vld [vmem:[%s118 + $0x31] sm:$0xff]
    %v1308 = vld [vmem:[%s118 + $0x39] sm:$0xff]
    %v1309 = vld [vmem:[%s118 + $0x41] sm:$0x3]
    %v1310 = vld [vmem:[%s118 + $0x49] sm:$0xff]
    %v1311 = vld [vmem:[%s118 + $0x51] sm:$0xff]
    %v1312 = vld [vmem:[%s118 + $0x59] sm:$0x3]
    %v1313 = vld [vmem:[%s118 + $0x61] sm:$0xff]
    %v1314 = vld [vmem:[%s118 + $0x69] sm:$0xff]
    %v1315 = vld [vmem:[%s118 + $0x71] sm:$0x3]
    %v1316 = vld [vmem:[%s118 + $0x79] sm:$0xff]
    %v1317 = vld [vmem:[%s118 + $0x81] sm:$0xff]
    %v1318 = vld [vmem:[%s118 + $0x89] sm:$0x3]
    %v1319 = vld [vmem:[%s118 + $0x91] sm:$0xff]
    %v1320 = vld [vmem:[%s118 + $0x99] sm:$0xff]
    %v1321 = vld [vmem:[%s118 + $0xa1] sm:$0x3]
    %v1322 = vld [vmem:[%s118 + $0xa9] sm:$0xff]
    %v1323 = vld [vmem:[%s118 + $0xb1] sm:$0xff]
    %v1324 = vld [vmem:[%s118 + $0xb9] sm:$0x3]
    %v1325 = vld [vmem:[%s118 + $0xc1] sm:$0xff]
    %v1326 = vld [vmem:[%s118 + $0xc9] sm:$0xff]
    %v1327 = vld [vmem:[%s118 + $0xd1] sm:$0x3]
    %v1328 = vld [vmem:[%s118 + $0xd9] sm:$0xff]
    %v1329 = vld [vmem:[%s118 + $0xe1] sm:$0xff]
    %v1330 = vld [vmem:[%s118 + $0xe9] sm:$0x3]
    %v1331 = vld [vmem:[%s118 + $0xf1] sm:$0xff]
    %v1332 = vld [vmem:[%s118 + $0xf9] sm:$0xff]
    %v1333 = vld [vmem:[%s118 + $0x101] sm:$0x3]
    %v1334 = vld [vmem:[%s118 + $0x109] sm:$0xff]
    %v1335 = vld [vmem:[%s118 + $0x111] sm:$0xff]
    %v1336 = vld [vmem:[%s118 + $0x119] sm:$0x3]
    %v1337 = vld [vmem:[%s118 + $0x121] sm:$0xff]
    %v1338 = vld [vmem:[%s118 + $0x129] sm:$0xff]
    %v1339 = vld [vmem:[%s118 + $0x131] sm:$0x3]
    %v1340 = vld [vmem:[%s118 + $0x139] sm:$0xff]
    %v1341 = vld [vmem:[%s118 + $0x141] sm:$0xff]
    %v1342 = vld [vmem:[%s118 + $0x149] sm:$0x3]
    %v1343 = vld [vmem:[%s118 + $0x151] sm:$0xff]
    %v1344 = vld [vmem:[%s118 + $0x159] sm:$0xff]
    %v1345 = vld [vmem:[%s118 + $0x161] sm:$0x3]
    %v1346 = vld [vmem:[%s118 + $0x169] sm:$0xff]
    %v1347 = vld [vmem:[%s118 + $0x171] sm:$0xff]
    %v1348 = vld [vmem:[%s118 + $0x179] sm:$0x3]
    %v1349 = vld [vmem:[%s118 + $0x181] sm:$0xff]
    %v1350 = vld [vmem:[%s118 + $0x189] sm:$0xff]
    %v1351 = vld [vmem:[%s118 + $0x191] sm:$0x3]
    %v1352 = vld [vmem:[%s118 + $0x199] sm:$0xff]
    %v1353 = vld [vmem:[%s118 + $0x1a1] sm:$0xff]
    %v1354 = vld [vmem:[%s118 + $0x1a9] sm:$0x3]
    %v1355 = vstv %s1300
    %v1356 = vmul.f32 %v1355, %v1301
    %v1357 = vmul.f32 %v1355, %v1302
    %v1358 = vmul.f32 %v1355, %v1303
    %v1359 = vmul.f32 %v1355, %v1304
    %v1360 = vmul.f32 %v1355, %v1305
    %v1361 = vmul.f32 %v1355, %v1306
    %v1362 = vmul.f32 %v1355, %v1307
    %v1363 = vmul.f32 %v1355, %v1308
    %v1364 = vmul.f32 %v1355, %v1309
    %v1365 = vmul.f32 %v1355, %v1310
    %v1366 = vmul.f32 %v1355, %v1311
    %v1367 = vmul.f32 %v1355, %v1312
    %v1368 = vmul.f32 %v1355, %v1313
    %v1369 = vmul.f32 %v1355, %v1314
    %v1370 = vmul.f32 %v1355, %v1315
    %v1371 = vmul.f32 %v1355, %v1316
    %v1372 = vmul.f32 %v1355, %v1317
    %v1373 = vmul.f32 %v1355, %v1318
    %v1374 = vmul.f32 %v1355, %v1319
    %v1375 = vmul.f32 %v1355, %v1320
    %v1376 = vmul.f32 %v1355, %v1321
    %v1377 = vmul.f32 %v1355, %v1322
    %v1378 = vmul.f32 %v1355, %v1323
    %v1379 = vmul.f32 %v1355, %v1324
    %v1380 = vmul.f32 %v1355, %v1325
    %v1381 = vmul.f32 %v1355, %v1326
    %v1382 = vmul.f32 %v1355, %v1327
    %v1383 = vmul.f32 %v1355, %v1328
    %v1384 = vmul.f32 %v1355, %v1329
    %v1385 = vmul.f32 %v1355, %v1330
    %v1386 = vmul.f32 %v1355, %v1331
    %v1387 = vmul.f32 %v1355, %v1332
    %v1388 = vmul.f32 %v1355, %v1333
    %v1389 = vmul.f32 %v1355, %v1334
    %v1390 = vmul.f32 %v1355, %v1335
    %v1391 = vmul.f32 %v1355, %v1336
    %v1392 = vmul.f32 %v1355, %v1337
    %v1393 = vmul.f32 %v1355, %v1338
    %v1394 = vmul.f32 %v1355, %v1339
    %v1395 = vmul.f32 %v1355, %v1340
    %v1396 = vmul.f32 %v1355, %v1341
    %v1397 = vmul.f32 %v1355, %v1342
    %v1398 = vmul.f32 %v1355, %v1343
    %v1399 = vmul.f32 %v1355, %v1344
    %v1400 = vmul.f32 %v1355, %v1345
    %v1401 = vmul.f32 %v1355, %v1346
    %v1402 = vmul.f32 %v1355, %v1347
    %v1403 = vmul.f32 %v1355, %v1348
    %v1404 = vmul.f32 %v1355, %v1349
    %v1405 = vmul.f32 %v1355, %v1350
    %v1406 = vmul.f32 %v1355, %v1351
    %v1407 = vmul.f32 %v1355, %v1352
    %v1408 = vmul.f32 %v1355, %v1353
    %v1409 = vmul.f32 %v1355, %v1354
    %v1410 = vadd.f32 %v1246, %v1356
    %v1411 = vadd.f32 %v1247, %v1357
    %v1412 = vadd.f32 %v1248, %v1358
    %v1413 = vadd.f32 %v1249, %v1359
    %v1414 = vadd.f32 %v1250, %v1360
    %v1415 = vadd.f32 %v1251, %v1361
    %v1416 = vadd.f32 %v1252, %v1362
    %v1417 = vadd.f32 %v1253, %v1363
    %v1418 = vadd.f32 %v1254, %v1364
    %v1419 = vadd.f32 %v1255, %v1365
    %v1420 = vadd.f32 %v1256, %v1366
    %v1421 = vadd.f32 %v1257, %v1367
    %v1422 = vadd.f32 %v1258, %v1368
    %v1423 = vadd.f32 %v1259, %v1369
    %v1424 = vadd.f32 %v1260, %v1370
    %v1425 = vadd.f32 %v1261, %v1371
    %v1426 = vadd.f32 %v1262, %v1372
    %v1427 = vadd.f32 %v1263, %v1373
    %v1428 = vadd.f32 %v1264, %v1374
    %v1429 = vadd.f32 %v1265, %v1375
    %v1430 = vadd.f32 %v1266, %v1376
    %v1431 = vadd.f32 %v1267, %v1377
    %v1432 = vadd.f32 %v1268, %v1378
    %v1433 = vadd.f32 %v1269, %v1379
    %v1434 = vadd.f32 %v1270, %v1380
    %v1435 = vadd.f32 %v1271, %v1381
    %v1436 = vadd.f32 %v1272, %v1382
    %v1437 = vadd.f32 %v1273, %v1383
    %v1438 = vadd.f32 %v1274, %v1384
    %v1439 = vadd.f32 %v1275, %v1385
    %v1440 = vadd.f32 %v1276, %v1386
    %v1441 = vadd.f32 %v1277, %v1387
    %v1442 = vadd.f32 %v1278, %v1388
    %v1443 = vadd.f32 %v1279, %v1389
    %v1444 = vadd.f32 %v1280, %v1390
    %v1445 = vadd.f32 %v1281, %v1391
    %v1446 = vadd.f32 %v1282, %v1392
    %v1447 = vadd.f32 %v1283, %v1393
    %v1448 = vadd.f32 %v1284, %v1394
    %v1449 = vadd.f32 %v1285, %v1395
    %v1450 = vadd.f32 %v1286, %v1396
    %v1451 = vadd.f32 %v1287, %v1397
    %v1452 = vadd.f32 %v1288, %v1398
    %v1453 = vadd.f32 %v1289, %v1399
    %v1454 = vadd.f32 %v1290, %v1400
    %v1455 = vadd.f32 %v1291, %v1401
    %v1456 = vadd.f32 %v1292, %v1402
    %v1457 = vadd.f32 %v1293, %v1403
    %v1458 = vadd.f32 %v1294, %v1404
    %v1459 = vadd.f32 %v1295, %v1405
    %v1460 = vadd.f32 %v1296, %v1406
    %v1461 = vadd.f32 %v1297, %v1407
    %v1462 = vadd.f32 %v1298, %v1408
    %v1463 = vadd.f32 %v1299, %v1409
    %s1464 = sld [smem:[#allocation3 + $0x8]]
    %v1465 = vld [vmem:[%s118 + $0x2] sm:$0xff]
    %v1466 = vld [vmem:[%s118 + $0xa] sm:$0xff]
    %v1467 = vld [vmem:[%s118 + $0x12] sm:$0x3]
    %v1468 = vld [vmem:[%s118 + $0x1a] sm:$0xff]
    %v1469 = vld [vmem:[%s118 + $0x22] sm:$0xff]
    %v1470 = vld [vmem:[%s118 + $0x2a] sm:$0x3]
    %v1471 = vld [vmem:[%s118 + $0x32] sm:$0xff]
    %v1472 = vld [vmem:[%s118 + $0x3a] sm:$0xff]
    %v1473 = vld [vmem:[%s118 + $0x42] sm:$0x3]
    %v1474 = vld [vmem:[%s118 + $0x4a] sm:$0xff]
    %v1475 = vld [vmem:[%s118 + $0x52] sm:$0xff]
    %v1476 = vld [vmem:[%s118 + $0x5a] sm:$0x3]
    %v1477 = vld [vmem:[%s118 + $0x62] sm:$0xff]
    %v1478 = vld [vmem:[%s118 + $0x6a] sm:$0xff]
    %v1479 = vld [vmem:[%s118 + $0x72] sm:$0x3]
    %v1480 = vld [vmem:[%s118 + $0x7a] sm:$0xff]
    %v1481 = vld [vmem:[%s118 + $0x82] sm:$0xff]
    %v1482 = vld [vmem:[%s118 + $0x8a] sm:$0x3]
    %v1483 = vld [vmem:[%s118 + $0x92] sm:$0xff]
    %v1484 = vld [vmem:[%s118 + $0x9a] sm:$0xff]
    %v1485 = vld [vmem:[%s118 + $0xa2] sm:$0x3]
    %v1486 = vld [vmem:[%s118 + $0xaa] sm:$0xff]
    %v1487 = vld [vmem:[%s118 + $0xb2] sm:$0xff]
    %v1488 = vld [vmem:[%s118 + $0xba] sm:$0x3]
    %v1489 = vld [vmem:[%s118 + $0xc2] sm:$0xff]
    %v1490 = vld [vmem:[%s118 + $0xca] sm:$0xff]
    %v1491 = vld [vmem:[%s118 + $0xd2] sm:$0x3]
    %v1492 = vld [vmem:[%s118 + $0xda] sm:$0xff]
    %v1493 = vld [vmem:[%s118 + $0xe2] sm:$0xff]
    %v1494 = vld [vmem:[%s118 + $0xea] sm:$0x3]
    %v1495 = vld [vmem:[%s118 + $0xf2] sm:$0xff]
    %v1496 = vld [vmem:[%s118 + $0xfa] sm:$0xff]
    %v1497 = vld [vmem:[%s118 + $0x102] sm:$0x3]
    %v1498 = vld [vmem:[%s118 + $0x10a] sm:$0xff]
    %v1499 = vld [vmem:[%s118 + $0x112] sm:$0xff]
    %v1500 = vld [vmem:[%s118 + $0x11a] sm:$0x3]
    %v1501 = vld [vmem:[%s118 + $0x122] sm:$0xff]
    %v1502 = vld [vmem:[%s118 + $0x12a] sm:$0xff]
    %v1503 = vld [vmem:[%s118 + $0x132] sm:$0x3]
    %v1504 = vld [vmem:[%s118 + $0x13a] sm:$0xff]
    %v1505 = vld [vmem:[%s118 + $0x142] sm:$0xff]
    %v1506 = vld [vmem:[%s118 + $0x14a] sm:$0x3]
    %v1507 = vld [vmem:[%s118 + $0x152] sm:$0xff]
    %v1508 = vld [vmem:[%s118 + $0x15a] sm:$0xff]
    %v1509 = vld [vmem:[%s118 + $0x162] sm:$0x3]
    %v1510 = vld [vmem:[%s118 + $0x16a] sm:$0xff]
    %v1511 = vld [vmem:[%s118 + $0x172] sm:$0xff]
    %v1512 = vld [vmem:[%s118 + $0x17a] sm:$0x3]
    %v1513 = vld [vmem:[%s118 + $0x182] sm:$0xff]
    %v1514 = vld [vmem:[%s118 + $0x18a] sm:$0xff]
    %v1515 = vld [vmem:[%s118 + $0x192] sm:$0x3]
    %v1516 = vld [vmem:[%s118 + $0x19a] sm:$0xff]
    %v1517 = vld [vmem:[%s118 + $0x1a2] sm:$0xff]
    %v1518 = vld [vmem:[%s118 + $0x1aa] sm:$0x3]
    %v1519 = vstv %s1464
    %v1520 = vmul.f32 %v1519, %v1465
    %v1521 = vmul.f32 %v1519, %v1466
    %v1522 = vmul.f32 %v1519, %v1467
    %v1523 = vmul.f32 %v1519, %v1468
    %v1524 = vmul.f32 %v1519, %v1469
    %v1525 = vmul.f32 %v1519, %v1470
    %v1526 = vmul.f32 %v1519, %v1471
    %v1527 = vmul.f32 %v1519, %v1472
    %v1528 = vmul.f32 %v1519, %v1473
    %v1529 = vmul.f32 %v1519, %v1474
    %v1530 = vmul.f32 %v1519, %v1475
    %v1531 = vmul.f32 %v1519, %v1476
    %v1532 = vmul.f32 %v1519, %v1477
    %v1533 = vmul.f32 %v1519, %v1478
    %v1534 = vmul.f32 %v1519, %v1479
    %v1535 = vmul.f32 %v1519, %v1480
    %v1536 = vmul.f32 %v1519, %v1481
    %v1537 = vmul.f32 %v1519, %v1482
    %v1538 = vmul.f32 %v1519, %v1483
    %v1539 = vmul.f32 %v1519, %v1484
    %v1540 = vmul.f32 %v1519, %v1485
    %v1541 = vmul.f32 %v1519, %v1486
    %v1542 = vmul.f32 %v1519, %v1487
    %v1543 = vmul.f32 %v1519, %v1488
    %v1544 = vmul.f32 %v1519, %v1489
    %v1545 = vmul.f32 %v1519, %v1490
    %v1546 = vmul.f32 %v1519, %v1491
    %v1547 = vmul.f32 %v1519, %v1492
    %v1548 = vmul.f32 %v1519, %v1493
    %v1549 = vmul.f32 %v1519, %v1494
    %v1550 = vmul.f32 %v1519, %v1495
    %v1551 = vmul.f32 %v1519, %v1496
    %v1552 = vmul.f32 %v1519, %v1497
    %v1553 = vmul.f32 %v1519, %v1498
    %v1554 = vmul.f32 %v1519, %v1499
    %v1555 = vmul.f32 %v1519, %v1500
    %v1556 = vmul.f32 %v1519, %v1501
    %v1557 = vmul.f32 %v1519, %v1502
    %v1558 = vmul.f32 %v1519, %v1503
    %v1559 = vmul.f32 %v1519, %v1504
    %v1560 = vmul.f32 %v1519, %v1505
    %v1561 = vmul.f32 %v1519, %v1506
    %v1562 = vmul.f32 %v1519, %v1507
    %v1563 = vmul.f32 %v1519, %v1508
    %v1564 = vmul.f32 %v1519, %v1509
    %v1565 = vmul.f32 %v1519, %v1510
    %v1566 = vmul.f32 %v1519, %v1511
    %v1567 = vmul.f32 %v1519, %v1512
    %v1568 = vmul.f32 %v1519, %v1513
    %v1569 = vmul.f32 %v1519, %v1514
    %v1570 = vmul.f32 %v1519, %v1515
    %v1571 = vmul.f32 %v1519, %v1516
    %v1572 = vmul.f32 %v1519, %v1517
    %v1573 = vmul.f32 %v1519, %v1518
    %v1574 = vadd.f32 %v1410, %v1520
    %v1575 = vadd.f32 %v1411, %v1521
    %v1576 = vadd.f32 %v1412, %v1522
    %v1577 = vadd.f32 %v1413, %v1523
    %v1578 = vadd.f32 %v1414, %v1524
    %v1579 = vadd.f32 %v1415, %v1525
    %v1580 = vadd.f32 %v1416, %v1526
    %v1581 = vadd.f32 %v1417, %v1527
    %v1582 = vadd.f32 %v1418, %v1528
    %v1583 = vadd.f32 %v1419, %v1529
    %v1584 = vadd.f32 %v1420, %v1530
    %v1585 = vadd.f32 %v1421, %v1531
    %v1586 = vadd.f32 %v1422, %v1532
    %v1587 = vadd.f32 %v1423, %v1533
    %v1588 = vadd.f32 %v1424, %v1534
    %v1589 = vadd.f32 %v1425, %v1535
    %v1590 = vadd.f32 %v1426, %v1536
    %v1591 = vadd.f32 %v1427, %v1537
    %v1592 = vadd.f32 %v1428, %v1538
    %v1593 = vadd.f32 %v1429, %v1539
    %v1594 = vadd.f32 %v1430, %v1540
    %v1595 = vadd.f32 %v1431, %v1541
    %v1596 = vadd.f32 %v1432, %v1542
    %v1597 = vadd.f32 %v1433, %v1543
    %v1598 = vadd.f32 %v1434, %v1544
    %v1599 = vadd.f32 %v1435, %v1545
    %v1600 = vadd.f32 %v1436, %v1546
    %v1601 = vadd.f32 %v1437, %v1547
    %v1602 = vadd.f32 %v1438, %v1548
    %v1603 = vadd.f32 %v1439, %v1549
    %v1604 = vadd.f32 %v1440, %v1550
    %v1605 = vadd.f32 %v1441, %v1551
    %v1606 = vadd.f32 %v1442, %v1552
    %v1607 = vadd.f32 %v1443, %v1553
    %v1608 = vadd.f32 %v1444, %v1554
    %v1609 = vadd.f32 %v1445, %v1555
    %v1610 = vadd.f32 %v1446, %v1556
    %v1611 = vadd.f32 %v1447, %v1557
    %v1612 = vadd.f32 %v1448, %v1558
    %v1613 = vadd.f32 %v1449, %v1559
    %v1614 = vadd.f32 %v1450, %v1560
    %v1615 = vadd.f32 %v1451, %v1561
    %v1616 = vadd.f32 %v1452, %v1562
    %v1617 = vadd.f32 %v1453, %v1563
    %v1618 = vadd.f32 %v1454, %v1564
    %v1619 = vadd.f32 %v1455, %v1565
    %v1620 = vadd.f32 %v1456, %v1566
    %v1621 = vadd.f32 %v1457, %v1567
    %v1622 = vadd.f32 %v1458, %v1568
    %v1623 = vadd.f32 %v1459, %v1569
    %v1624 = vadd.f32 %v1460, %v1570
    %v1625 = vadd.f32 %v1461, %v1571
    %v1626 = vadd.f32 %v1462, %v1572
    %v1627 = vadd.f32 %v1463, %v1573
    %1628 = vst.msk [vmem:[%s2] sm:$0xff] %vm24, %v1574
    %1629 = vst.msk [vmem:[%s2 + $0x8] sm:$0xff] %vm24, %v1575
    %vm1630 = vcmask 58368
    %1631 = vst.msk [vmem:[%s2 + $0x10] sm:$0x3] %vm1630, %v1576
    %1632 = vst.msk [vmem:[%s2 + $0x18] sm:$0xff] %vm24, %v1577
    %1633 = vst.msk [vmem:[%s2 + $0x20] sm:$0xff] %vm24, %v1578
    %1634 = vst.msk [vmem:[%s2 + $0x28] sm:$0x3] %vm1630, %v1579
    %1635 = vst.msk [vmem:[%s2 + $0x30] sm:$0xff] %vm24, %v1580
    %1636 = vst.msk [vmem:[%s2 + $0x38] sm:$0xff] %vm24, %v1581
    %1637 = vst.msk [vmem:[%s2 + $0x40] sm:$0x3] %vm1630, %v1582
    %1638 = vst.msk [vmem:[%s2 + $0x48] sm:$0xff] %vm24, %v1583
    %1639 = vst.msk [vmem:[%s2 + $0x50] sm:$0xff] %vm24, %v1584
    %1640 = vst.msk [vmem:[%s2 + $0x58] sm:$0x3] %vm1630, %v1585
    %1641 = vst.msk [vmem:[%s2 + $0x60] sm:$0xff] %vm24, %v1586
    %1642 = vst.msk [vmem:[%s2 + $0x68] sm:$0xff] %vm24, %v1587
    %1643 = vst.msk [vmem:[%s2 + $0x70] sm:$0x3] %vm1630, %v1588
    %1644 = vst.msk [vmem:[%s2 + $0x78] sm:$0xff] %vm24, %v1589
    %1645 = vst.msk [vmem:[%s2 + $0x80] sm:$0xff] %vm24, %v1590
    %1646 = vst.msk [vmem:[%s2 + $0x88] sm:$0x3] %vm1630, %v1591
    %1647 = vst.msk [vmem:[%s2 + $0x90] sm:$0xff] %vm24, %v1592
    %1648 = vst.msk [vmem:[%s2 + $0x98] sm:$0xff] %vm24, %v1593
    %1649 = vst.msk [vmem:[%s2 + $0xa0] sm:$0x3] %vm1630, %v1594
    %1650 = vst.msk [vmem:[%s2 + $0xa8] sm:$0xff] %vm24, %v1595
    %1651 = vst.msk [vmem:[%s2 + $0xb0] sm:$0xff] %vm24, %v1596
    %1652 = vst.msk [vmem:[%s2 + $0xb8] sm:$0x3] %vm1630, %v1597
    %1653 = vst.msk [vmem:[%s2 + $0xc0] sm:$0xff] %vm24, %v1598
    %1654 = vst.msk [vmem:[%s2 + $0xc8] sm:$0xff] %vm24, %v1599
    %1655 = vst.msk [vmem:[%s2 + $0xd0] sm:$0x3] %vm1630, %v1600
    %1656 = vst.msk [vmem:[%s2 + $0xd8] sm:$0xff] %vm24, %v1601
    %1657 = vst.msk [vmem:[%s2 + $0xe0] sm:$0xff] %vm24, %v1602
    %1658 = vst.msk [vmem:[%s2 + $0xe8] sm:$0x3] %vm1630, %v1603
    %1659 = vst.msk [vmem:[%s2 + $0xf0] sm:$0xff] %vm24, %v1604
    %1660 = vst.msk [vmem:[%s2 + $0xf8] sm:$0xff] %vm24, %v1605
    %1661 = vst.msk [vmem:[%s2 + $0x100] sm:$0x3] %vm1630, %v1606
    %1662 = vst.msk [vmem:[%s2 + $0x108] sm:$0xff] %vm24, %v1607
    %1663 = vst.msk [vmem:[%s2 + $0x110] sm:$0xff] %vm24, %v1608
    %1664 = vst.msk [vmem:[%s2 + $0x118] sm:$0x3] %vm1630, %v1609
    %1665 = vst.msk [vmem:[%s2 + $0x120] sm:$0xff] %vm24, %v1610
    %1666 = vst.msk [vmem:[%s2 + $0x128] sm:$0xff] %vm24, %v1611
    %1667 = vst.msk [vmem:[%s2 + $0x130] sm:$0x3] %vm1630, %v1612
    %1668 = vst.msk [vmem:[%s2 + $0x138] sm:$0xff] %vm24, %v1613
    %1669 = vst.msk [vmem:[%s2 + $0x140] sm:$0xff] %vm24, %v1614
    %1670 = vst.msk [vmem:[%s2 + $0x148] sm:$0x3] %vm1630, %v1615
    %1671 = vst.msk [vmem:[%s2 + $0x150] sm:$0xff] %vm24, %v1616
    %1672 = vst.msk [vmem:[%s2 + $0x158] sm:$0xff] %vm24, %v1617
    %1673 = vst.msk [vmem:[%s2 + $0x160] sm:$0x3] %vm1630, %v1618
    %1674 = vst.msk [vmem:[%s2 + $0x168] sm:$0xff] %vm24, %v1619
    %1675 = vst.msk [vmem:[%s2 + $0x170] sm:$0xff] %vm24, %v1620
    %1676 = vst.msk [vmem:[%s2 + $0x178] sm:$0x3] %vm1630, %v1621
    %1677 = vst.msk [vmem:[%s2 + $0x180] sm:$0xff] %vm24, %v1622
    %1678 = vst.msk [vmem:[%s2 + $0x188] sm:$0xff] %vm24, %v1623
    %1679 = vst.msk [vmem:[%s2 + $0x190] sm:$0x3] %vm1630, %v1624
    %1680 = vst.msk [vmem:[%s2 + $0x198] sm:$0xff] %vm24, %v1625
    %1681 = vst.msk [vmem:[%s2 + $0x1a0] sm:$0xff] %vm24, %v1626
    %1682 = vst.msk [vmem:[%s2 + $0x1a8] sm:$0x3] %vm1630, %v1627
    // Predicated region
    $region14: #{splatter_forward.1} parent=1 // pred_check
      _
    $region15: #{splatter_forward.1} parent=1 // pred_check_branch
      %1684 = sbr.rel (0) target = $region17
    $region16: #{splatter_forward.1} parent=1 // pred_region
      _
    $region17: #{splatter_forward.1} parent=1 // pred_fallthru
      _
    // Predicated region
    $region18: #{splatter_forward.1} parent=1 // pred_check
      _
    $region19: #{splatter_forward.1} parent=1 // pred_check_branch
      %1686 = sbr.rel (0) target = $region21
    $region20: #{splatter_forward.1} parent=1 // pred_region
      _
    $region21: #{splatter_forward.1} parent=1 // pred_fallthru
      _
    %1687 = vsyncpa [#allocation4], 1

</llo_original>
